<compile_context>
chip_gen: v6e
topology: v6e:2x2x1
jax: 0.10.0
libtpu: 0.0.40
codegen_flags: <defaults>
</compile_context>

<pallas_src>
import jax
import jax.numpy as jnp
from jax.experimental import pallas as pl
from jax.experimental.pallas import tpu as pltpu  # noqa: F401  (TPU backend; reserved for CompilerParams if needed)

# ---------------------------------------------------------------------------
# problem sizes (small, consistent with the module)
# ---------------------------------------------------------------------------
B = 2          # batch
S = 8          # sequence length
H = 32         # hidden_size
NH = 4         # num_heads
DK = H // NH   # att_size per head


# ---------------------------------------------------------------------------
# kernel: whole problem in one invocation (everything fits in VMEM)
# ---------------------------------------------------------------------------
def mha_kernel(xcat_ref, bias_ref, wqkv_ref, bqkv_ref, wo_ref, bo_ref, o_ref):
    # Fused Q/K/V projection: one MXU matmul (16 rows x 96 output lanes).
    # wqkv is block-diagonal diag(Wq*scale, Wk, Wv); bqkv = [bq*scale | bk | bv].
    x = xcat_ref[...]                                                  # (B*S, 3H)
    qkv = jnp.dot(x, wqkv_ref[...],
                  preferred_element_type=jnp.float32) + bqkv_ref[...]  # (B*S, 3H)

    # Carve heads out with static lane slices (width DK) and batch them as
    # (B*NH, S, DK).  reshape(B, S, DK) splits the 16-row sublane axis at the
    # native 8-row boundary, so no lane relayout is required.
    def split_heads(base):
        cols = [qkv[:, base + h * DK: base + (h + 1) * DK].reshape(B, S, DK)
                for h in range(NH)]
        return jnp.stack(cols, axis=1).reshape(B * NH, S, DK)

    qh = split_heads(0)        # scale already folded into wqkv / bqkv
    kh = split_heads(H)
    vh = split_heads(2 * H)

    # Attention scores + bias (bias pre-flattened to (B*NH, S, S) in wrapper).
    s = jnp.einsum("nqd,nkd->nqk", qh, kh,
                   preferred_element_type=jnp.float32) + bias_ref[...]

    # Explicit softmax; att_dropout is identity in eval mode.
    m = jnp.max(s, axis=-1, keepdims=True)
    e = jnp.exp(s - m)
    denom = jnp.sum(e, axis=-1, keepdims=True)
    p = e * pl.reciprocal(denom, approx=True)        # EUP reciprocal + VPU multiply

    ctx = jnp.einsum("nqk,nkd->nqd", p, vh,
                     preferred_element_type=jnp.float32)               # (B*NH, S, DK)

    # Concat heads along lanes -> (B*S, H); single output matmul with K=H.
    ctx4 = ctx.reshape(B, NH, S, DK)
    ctx_cat = jnp.concatenate(
        [ctx4[:, h].reshape(B * S, DK) for h in range(NH)], axis=-1)   # (B*S, H)
    out = jnp.dot(ctx_cat, wo_ref[...],
                  preferred_element_type=jnp.float32) + bo_ref[...]
    o_ref[...] = out.astype(o_ref.dtype)


# ---------------------------------------------------------------------------
# wrapper
# ---------------------------------------------------------------------------
def multi_head_attention(q, k, v, attn_bias, params):
    """q, k, v: (B, S, H) f32; attn_bias: (B, NH, S, S) f32 -> (B, S, H) f32."""
    scale = DK ** (-0.5)

    # Fused block-diagonal QKV weight.  The 1/sqrt(att_size) scale is folded
    # into the Q block and q bias, matching the reference (x@Wq + bq) * scale.
    w_qkv = jnp.zeros((3 * H, 3 * H), jnp.float32)
    w_qkv = w_qkv.at[0:H, 0:H].set(params["wq"] * scale)
    w_qkv = w_qkv.at[H:2 * H, H:2 * H].set(params["wk"])
    w_qkv = w_qkv.at[2 * H:3 * H, 2 * H:3 * H].set(params["wv"])
    b_qkv = jnp.concatenate(
        [params["bq"] * scale, params["bk"], params["bv"]], axis=-1)   # (1, 3H)

    x_cat = jnp.concatenate([q, k, v], axis=-1).reshape(B * S, 3 * H)  # (B*S, 3H)
    bias = attn_bias.reshape(B * NH, S, S)                             # (B*NH, S, S)

    # Advisory cost estimate for XLA's scheduler around the custom call.
    flops = (2 * (B * S) * (3 * H) * (3 * H)        # fused QKV projection
             + 2 * 2 * (B * NH) * S * S * DK        # scores + context
             + 2 * (B * S) * H * H)                 # output projection
    transcendentals = B * NH * S * S                # exp in softmax
    bytes_accessed = 4 * (x_cat.size + bias.size + w_qkv.size + b_qkv.size
                          + params["wo"].size + params["bo"].size + B * S * H)

    out = pl.pallas_call(
        mha_kernel,
        out_shape=jax.ShapeDtypeStruct((B * S, H), jnp.float32),
        cost_estimate=pl.CostEstimate(flops=flops,
                                      transcendentals=transcendentals,
                                      bytes_accessed=bytes_accessed),
    )(x_cat, bias, w_qkv, b_qkv, params["wo"], params["bo"])
    return out.reshape(B, S, H)


# ---------------------------------------------------------------------------
# pure-JAX reference (mirrors the PyTorch forward, eval mode)
# ---------------------------------------------------------------------------
def mha_ref(q, k, v, attn_bias, p):
    qh = (q @ p["wq"] + p["bq"]).reshape(B, S, NH, DK).transpose(0, 2, 1, 3)
    qh = qh * (DK ** -0.5)
    kh = (k @ p["wk"] + p["bk"]).reshape(B, S, NH, DK).transpose(0, 2, 1, 3)
    vh = (v @ p["wv"] + p["bv"]).reshape(B, S, NH, DK).transpose(0, 2, 1, 3)
    s = jnp.einsum("bhqd,bhkd->bhqk", qh, kh) + attn_bias
    a = jax.nn.softmax(s, axis=-1)
    ctx = jnp.einsum("bhqk,bhkd->bhqd", a, vh)
    ctx = ctx.transpose(0, 2, 1, 3).reshape(B, S, H)
    return ctx @ p["wo"] + p["bo"]


def init_params(key):
    keys = jax.random.split(key, 8)
    scale_h = 1.0 / jnp.sqrt(H)
    return {
        "wq": jax.random.normal(keys[0], (H, H), jnp.float32) * scale_h,
        "bq": jax.random.normal(keys[1], (1, H), jnp.float32) * 0.02,
        "wk": jax.random.normal(keys[2], (H, H), jnp.float32) * scale_h,
        "bk": jax.random.normal(keys[3], (1, H), jnp.float32) * 0.02,
        "wv": jax.random.normal(keys[4], (H, H), jnp.float32) * scale_h,
        "bv": jax.random.normal(keys[5], (1, H), jnp.float32) * 0.02,
        "wo": jax.random.normal(keys[6], (H, H), jnp.float32) * scale_h,
        "bo": jax.random.normal(keys[7], (1, H), jnp.float32) * 0.02,
    }


if __name__ == "__main__":
    key = jax.random.PRNGKey(0)
    kq, kk, kv, kb, kp = jax.random.split(key, 5)

    q = jax.random.normal(kq, (B, S, H), jnp.float32)
    k = jax.random.normal(kk, (B, S, H), jnp.float32)
    v = jax.random.normal(kv, (B, S, H), jnp.float32)
    attn_bias = jax.random.normal(kb, (B, NH, S, S), jnp.float32) * 0.1
    params = init_params(kp)

    out = jax.block_until_ready(multi_head_attention(q, k, v, attn_bias, params))
    ref = jax.block_until_ready(mha_ref(q, k, v, attn_bias, params))

    assert out.shape == (B, S, H)
    # Tolerance loosened (1e-4 -> 2e-2) solely for the EUP approximate
    # reciprocal in the softmax normalization; structural errors would be O(1).
    assert jnp.max(jnp.abs(out - ref)) < 2e-2, "mismatch vs reference"

    # TODO(synk): bp_flag / breakpoint() debug branch of the PyTorch forward is
    # intentionally not translated (interactive debugging has no kernel analog).
    print("KERNEL_OK")
</pallas_src>

<mosaic_0001>
module attributes {stable_mosaic.version = 11 : i64} {
  func.func @mha_kernel(%arg0: memref<16x96xf32, #tpu.memory_space<vmem>>, %arg1: memref<8x8x8xf32, #tpu.memory_space<vmem>>, %arg2: memref<96x96xf32, #tpu.memory_space<vmem>>, %arg3: memref<1x96xf32, #tpu.memory_space<vmem>>, %arg4: memref<32x32xf32, #tpu.memory_space<vmem>>, %arg5: memref<1x32xf32, #tpu.memory_space<vmem>>, %arg6: memref<16x32xf32, #tpu.memory_space<vmem>>) attributes {dimension_semantics = [], scalar_prefetch = 0 : i64, scratch_operands = 0 : i64, tpu.core_type = #tpu.core_type<tc>} {
    %c0 = arith.constant 0 : index
    %c0_0 = arith.constant 0 : index
    %0 = vector.load %arg0[%c0, %c0_0] : memref<16x96xf32, #tpu.memory_space<vmem>>, vector<16x96xf32>
    %c0_1 = arith.constant 0 : index
    %c0_2 = arith.constant 0 : index
    %1 = vector.load %arg2[%c0_1, %c0_2] : memref<96x96xf32, #tpu.memory_space<vmem>>, vector<96x96xf32>
    %cst = arith.constant dense<0.000000e+00> : vector<16x96xf32>
    %2 = tpu.matmul %0, %1, %cst {dimension_numbers = #tpu.dot_dimension_numbers<[1], [0], [0], [1], [0, 0, 1, 1], [], []>} : vector<16x96xf32>, vector<96x96xf32>, vector<16x96xf32> -> vector<16x96xf32>
    %c0_3 = arith.constant 0 : index
    %c0_4 = arith.constant 0 : index
    %3 = vector.load %arg3[%c0_3, %c0_4] : memref<1x96xf32, #tpu.memory_space<vmem>>, vector<1x96xf32>
    %4 = vector.broadcast %3 : vector<1x96xf32> to vector<16x96xf32>
    %5 = arith.addf %2, %4 : vector<16x96xf32>
    %6 = vector.extract_strided_slice %5 {offsets = [0, 0], sizes = [16, 8], strides = [1, 1]} : vector<16x96xf32> to vector<16x8xf32>
    %7 = vector.shape_cast %6 : vector<16x8xf32> to vector<2x8x8xf32>
    %8 = vector.extract_strided_slice %5 {offsets = [0, 8], sizes = [16, 8], strides = [1, 1]} : vector<16x96xf32> to vector<16x8xf32>
    %9 = vector.shape_cast %8 : vector<16x8xf32> to vector<2x8x8xf32>
    %10 = vector.extract_strided_slice %5 {offsets = [0, 16], sizes = [16, 8], strides = [1, 1]} : vector<16x96xf32> to vector<16x8xf32>
    %11 = vector.shape_cast %10 : vector<16x8xf32> to vector<2x8x8xf32>
    %12 = vector.extract_strided_slice %5 {offsets = [0, 24], sizes = [16, 8], strides = [1, 1]} : vector<16x96xf32> to vector<16x8xf32>
    %13 = vector.shape_cast %12 : vector<16x8xf32> to vector<2x8x8xf32>
    %14 = vector.shape_cast %7 : vector<2x8x8xf32> to vector<2x1x8x8xf32>
    %15 = vector.shape_cast %9 : vector<2x8x8xf32> to vector<2x1x8x8xf32>
    %16 = vector.shape_cast %11 : vector<2x8x8xf32> to vector<2x1x8x8xf32>
    %17 = vector.shape_cast %13 : vector<2x8x8xf32> to vector<2x1x8x8xf32>
    %18 = tpu.concatenate %14, %15, %16, %17 in 1 : vector<2x1x8x8xf32>, vector<2x1x8x8xf32>, vector<2x1x8x8xf32>, vector<2x1x8x8xf32> -> vector<2x4x8x8xf32>
    %19 = vector.shape_cast %18 : vector<2x4x8x8xf32> to vector<8x8x8xf32>
    %20 = vector.extract_strided_slice %5 {offsets = [0, 32], sizes = [16, 8], strides = [1, 1]} : vector<16x96xf32> to vector<16x8xf32>
    %21 = vector.shape_cast %20 : vector<16x8xf32> to vector<2x8x8xf32>
    %22 = vector.extract_strided_slice %5 {offsets = [0, 40], sizes = [16, 8], strides = [1, 1]} : vector<16x96xf32> to vector<16x8xf32>
    %23 = vector.shape_cast %22 : vector<16x8xf32> to vector<2x8x8xf32>
    %24 = vector.extract_strided_slice %5 {offsets = [0, 48], sizes = [16, 8], strides = [1, 1]} : vector<16x96xf32> to vector<16x8xf32>
    %25 = vector.shape_cast %24 : vector<16x8xf32> to vector<2x8x8xf32>
    %26 = vector.extract_strided_slice %5 {offsets = [0, 56], sizes = [16, 8], strides = [1, 1]} : vector<16x96xf32> to vector<16x8xf32>
    %27 = vector.shape_cast %26 : vector<16x8xf32> to vector<2x8x8xf32>
    %28 = vector.shape_cast %21 : vector<2x8x8xf32> to vector<2x1x8x8xf32>
    %29 = vector.shape_cast %23 : vector<2x8x8xf32> to vector<2x1x8x8xf32>
    %30 = vector.shape_cast %25 : vector<2x8x8xf32> to vector<2x1x8x8xf32>
    %31 = vector.shape_cast %27 : vector<2x8x8xf32> to vector<2x1x8x8xf32>
    %32 = tpu.concatenate %28, %29, %30, %31 in 1 : vector<2x1x8x8xf32>, vector<2x1x8x8xf32>, vector<2x1x8x8xf32>, vector<2x1x8x8xf32> -> vector<2x4x8x8xf32>
    %33 = vector.shape_cast %32 : vector<2x4x8x8xf32> to vector<8x8x8xf32>
    %34 = vector.extract_strided_slice %5 {offsets = [0, 64], sizes = [16, 8], strides = [1, 1]} : vector<16x96xf32> to vector<16x8xf32>
    %35 = vector.shape_cast %34 : vector<16x8xf32> to vector<2x8x8xf32>
    %36 = vector.extract_strided_slice %5 {offsets = [0, 72], sizes = [16, 8], strides = [1, 1]} : vector<16x96xf32> to vector<16x8xf32>
    %37 = vector.shape_cast %36 : vector<16x8xf32> to vector<2x8x8xf32>
    %38 = vector.extract_strided_slice %5 {offsets = [0, 80], sizes = [16, 8], strides = [1, 1]} : vector<16x96xf32> to vector<16x8xf32>
    %39 = vector.shape_cast %38 : vector<16x8xf32> to vector<2x8x8xf32>
    %40 = vector.extract_strided_slice %5 {offsets = [0, 88], sizes = [16, 8], strides = [1, 1]} : vector<16x96xf32> to vector<16x8xf32>
    %41 = vector.shape_cast %40 : vector<16x8xf32> to vector<2x8x8xf32>
    %42 = vector.shape_cast %35 : vector<2x8x8xf32> to vector<2x1x8x8xf32>
    %43 = vector.shape_cast %37 : vector<2x8x8xf32> to vector<2x1x8x8xf32>
    %44 = vector.shape_cast %39 : vector<2x8x8xf32> to vector<2x1x8x8xf32>
    %45 = vector.shape_cast %41 : vector<2x8x8xf32> to vector<2x1x8x8xf32>
    %46 = tpu.concatenate %42, %43, %44, %45 in 1 : vector<2x1x8x8xf32>, vector<2x1x8x8xf32>, vector<2x1x8x8xf32>, vector<2x1x8x8xf32> -> vector<2x4x8x8xf32>
    %47 = vector.shape_cast %46 : vector<2x4x8x8xf32> to vector<8x8x8xf32>
    "tpu.trace_start"() <{level = 10 : i32, message = "nqd,nkd->nqk"}> : () -> ()
    %cst_5 = arith.constant dense<0.000000e+00> : vector<8x8x8xf32>
    %48 = tpu.matmul %19, %33, %cst_5 {dimension_numbers = #tpu.dot_dimension_numbers<[2], [2], [1], [1], [0, 0, 0, 1, 1, 1], [0], [0]>} : vector<8x8x8xf32>, vector<8x8x8xf32>, vector<8x8x8xf32> -> vector<8x8x8xf32>
    "tpu.trace_stop"() : () -> ()
    %c0_6 = arith.constant 0 : index
    %c0_7 = arith.constant 0 : index
    %c0_8 = arith.constant 0 : index
    %49 = vector.load %arg1[%c0_6, %c0_7, %c0_8] : memref<8x8x8xf32, #tpu.memory_space<vmem>>, vector<8x8x8xf32>
    %50 = arith.addf %48, %49 : vector<8x8x8xf32>
    %cst_9 = arith.constant dense<0xFF800000> : vector<8x8xf32>
    %51 = vector.multi_reduction <maximumf>, %50, %cst_9 [2] : vector<8x8x8xf32> to vector<8x8xf32>
    %52 = vector.shape_cast %51 : vector<8x8xf32> to vector<8x8x1xf32>
    %53 = vector.broadcast %52 : vector<8x8x1xf32> to vector<8x8x8xf32>
    %54 = arith.subf %50, %53 : vector<8x8x8xf32>
    %55 = math.exp %54 : vector<8x8x8xf32>
    %cst_10 = arith.constant dense<0.000000e+00> : vector<8x8xf32>
    %56 = vector.multi_reduction <add>, %55, %cst_10 [2] : vector<8x8x8xf32> to vector<8x8xf32>
    %57 = vector.shape_cast %56 : vector<8x8xf32> to vector<8x8x1xf32>
    %58 = tpu.reciprocal %57 {approx = true} : vector<8x8x1xf32> -> vector<8x8x1xf32>
    %59 = vector.broadcast %58 : vector<8x8x1xf32> to vector<8x8x8xf32>
    %60 = arith.mulf %55, %59 : vector<8x8x8xf32>
    "tpu.trace_start"() <{level = 10 : i32, message = "nqk,nkd->nqd"}> : () -> ()
    %cst_11 = arith.constant dense<0.000000e+00> : vector<8x8x8xf32>
    %61 = tpu.matmul %60, %47, %cst_11 {dimension_numbers = #tpu.dot_dimension_numbers<[2], [1], [1], [2], [0, 0, 0, 1, 1, 2], [0], [0]>} : vector<8x8x8xf32>, vector<8x8x8xf32>, vector<8x8x8xf32> -> vector<8x8x8xf32>
    "tpu.trace_stop"() : () -> ()
    %62 = vector.shape_cast %61 : vector<8x8x8xf32> to vector<2x4x8x8xf32>
    %63 = vector.extract_strided_slice %62 {offsets = [0, 0, 0, 0], sizes = [2, 1, 8, 8], strides = [1, 1, 1, 1]} : vector<2x4x8x8xf32> to vector<2x1x8x8xf32>
    %64 = vector.shape_cast %63 : vector<2x1x8x8xf32> to vector<2x8x8xf32>
    %65 = vector.shape_cast %64 : vector<2x8x8xf32> to vector<16x8xf32>
    %66 = vector.extract_strided_slice %62 {offsets = [0, 1, 0, 0], sizes = [2, 1, 8, 8], strides = [1, 1, 1, 1]} : vector<2x4x8x8xf32> to vector<2x1x8x8xf32>
    %67 = vector.shape_cast %66 : vector<2x1x8x8xf32> to vector<2x8x8xf32>
    %68 = vector.shape_cast %67 : vector<2x8x8xf32> to vector<16x8xf32>
    %69 = vector.extract_strided_slice %62 {offsets = [0, 2, 0, 0], sizes = [2, 1, 8, 8], strides = [1, 1, 1, 1]} : vector<2x4x8x8xf32> to vector<2x1x8x8xf32>
    %70 = vector.shape_cast %69 : vector<2x1x8x8xf32> to vector<2x8x8xf32>
    %71 = vector.shape_cast %70 : vector<2x8x8xf32> to vector<16x8xf32>
    %72 = vector.extract_strided_slice %62 {offsets = [0, 3, 0, 0], sizes = [2, 1, 8, 8], strides = [1, 1, 1, 1]} : vector<2x4x8x8xf32> to vector<2x1x8x8xf32>
    %73 = vector.shape_cast %72 : vector<2x1x8x8xf32> to vector<2x8x8xf32>
    %74 = vector.shape_cast %73 : vector<2x8x8xf32> to vector<16x8xf32>
    %75 = tpu.concatenate %65, %68, %71, %74 in 1 : vector<16x8xf32>, vector<16x8xf32>, vector<16x8xf32>, vector<16x8xf32> -> vector<16x32xf32>
    %c0_12 = arith.constant 0 : index
    %c0_13 = arith.constant 0 : index
    %76 = vector.load %arg4[%c0_12, %c0_13] : memref<32x32xf32, #tpu.memory_space<vmem>>, vector<32x32xf32>
    %cst_14 = arith.constant dense<0.000000e+00> : vector<16x32xf32>
    %77 = tpu.matmul %75, %76, %cst_14 {dimension_numbers = #tpu.dot_dimension_numbers<[1], [0], [0], [1], [0, 0, 1, 1], [], []>} : vector<16x32xf32>, vector<32x32xf32>, vector<16x32xf32> -> vector<16x32xf32>
    %c0_15 = arith.constant 0 : index
    %c0_16 = arith.constant 0 : index
    %78 = vector.load %arg5[%c0_15, %c0_16] : memref<1x32xf32, #tpu.memory_space<vmem>>, vector<1x32xf32>
    %79 = vector.broadcast %78 : vector<1x32xf32> to vector<16x32xf32>
    %80 = arith.addf %77, %79 : vector<16x32xf32>
    %c0_17 = arith.constant 0 : index
    %c0_18 = arith.constant 0 : index
    %81 = vector.load %arg6[%c0_17, %c0_18] : memref<16x32xf32, #tpu.memory_space<vmem>>, vector<16x32xf32>
    tpu.vector_store %arg6[%c0_17, %c0_18], %80 {strides = array<i32>} : memref<16x32xf32, #tpu.memory_space<vmem>>, vector<16x32xf32>,
    return
  }
}

</mosaic_0001>

<llo_original>
// kernel: tpu_custom_call.1
$region0: #{tpu_custom_call.1}
  #allocation0 [shape = 'u32[]', space=smem, size = 0x4, offset = 0x4, fixed_abs, tag = 'smem constant byte address 0x4 - core index']
  #allocation1 [shape = 'u32[144,128]{1,0:T(1,128)}', space=vmem, size = 0x12000, scoped, tag = 'internal scratch']
  %s0 = inlined_call_operand.hbm [shape: f32[16,96], index: 0, kind: input, shape index: {}]
  %s1 = inlined_call_operand.hbm [shape: f32[8,8,8], index: 1, kind: input, shape index: {}]
  %s2 = inlined_call_operand.hbm [shape: f32[96,96], index: 2, kind: input, shape index: {}]
  %s3 = inlined_call_operand.vmem [shape: f32[1,96], index: 3, kind: input, shape index: {}]
  %s4 = inlined_call_operand.hbm [shape: f32[32,32], index: 4, kind: input, shape index: {}]
  %s5 = inlined_call_operand.vmem [shape: f32[1,32], index: 5, kind: input, shape index: {}]
  %s6 = inlined_call_operand.hbm [shape: f32[16,32], index: 6, kind: output, shape index: {}]
  %s7 = sld [smem:[#allocation0]]
  $region50: #{tpu_custom_call.1} parent=0
    _
  %s9 = ssub.s32 1, %s7
  %s10 = scalar_select 0, %s9, %s7
  $region1: #{tpu_custom_call.1} parent=0
    #allocation2 [shape = 'u8[8192]{0}', space=vmem, size = 0x2000, scoped, tag = 'input window, operand 0, single buffered']
    #allocation3 [shape = 's32[1]{0}', space=sflag, size = 0x4, scoped, tag = 'scoped memory for tpu_custom_call.1']
    #allocation4 [shape = 's32[1]{0}', space=sflag, size = 0x4, scoped, tag = 'scoped memory for tpu_custom_call.1']
    #allocation5 [shape = 'u8[32768]{0}', space=vmem, size = 0x8000, scoped, tag = 'input window, operand 1, single buffered']
    #allocation6 [shape = 's32[1]{0}', space=sflag, size = 0x4, scoped, tag = 'scoped memory for tpu_custom_call.1']
    #allocation7 [shape = 'u8[49152]{0}', space=vmem, size = 0xc000, scoped, tag = 'input window, operand 2, single buffered']
    #allocation8 [shape = 'u8[16384]{0}', space=vmem, size = 0x4000, scoped, tag = 'input window, operand 4, single buffered']
    #allocation9 [shape = 's32[1]{0}', space=sflag, size = 0x4, scoped, tag = 'scoped memory for tpu_custom_call.1']
    #allocation10 [shape = 'u8[8192]{0}', space=vmem, size = 0x2000, scoped, tag = 'output window, operand 0, single buffered']
    %11 = vsyncpa [#allocation3], 0
    %12 = vsyncpa [#allocation6], 0
    %13 = vsyncpa [#allocation9], 0
    %14 = vsyncpa [#allocation4], 0
    // Predicated region
    $region2: #{tpu_custom_call.1} parent=1 // pred_check
      _
    $region3: #{tpu_custom_call.1} parent=1 // pred_check_branch
      %16 = sbr.rel (0) target = $region5
    $region4: #{tpu_custom_call.1} parent=1 // pred_region
      %s18 = ssub.s32 256, 256
      %19 = vsyncadd [#allocation3], %s18
      %s20 = sshll.u32 [#allocation2], 4
      %s21 = int_to_ptr.vmem [resolvable:$true] %s20
      %26 = dma.hbm_to_vmem [thread:$0]  %s0, 256, %s21, [#allocation3], 128, 128, 8
    $region5: #{tpu_custom_call.1} parent=1 // pred_fallthru
      _
    // Predicated region
    $region6: #{tpu_custom_call.1} parent=1 // pred_check
      _
    $region7: #{tpu_custom_call.1} parent=1 // pred_check_branch
      %28 = sbr.rel (0) target = $region9
    $region8: #{tpu_custom_call.1} parent=1 // pred_region
      %s30 = ssub.s32 1024, 1024
      %31 = vsyncadd [#allocation6], %s30
      %s32 = sshll.u32 [#allocation5], 4
      %s33 = int_to_ptr.vmem [resolvable:$true] %s32
      %38 = dma.hbm_to_vmem [thread:$0]  %s1, 1024, %s33, [#allocation6], 128, 128, 8
    $region9: #{tpu_custom_call.1} parent=1 // pred_fallthru
      _
    // Predicated region
    $region10: #{tpu_custom_call.1} parent=1 // pred_check
      _
    $region11: #{tpu_custom_call.1} parent=1 // pred_check_branch
      %40 = sbr.rel (0) target = $region13
    $region12: #{tpu_custom_call.1} parent=1 // pred_region
      %s42 = ssub.s32 1536, 1536
      %43 = vsyncadd [#allocation6], %s42
      %s44 = sshll.u32 [#allocation7], 4
      %s45 = int_to_ptr.vmem [resolvable:$true] %s44
      %50 = dma.hbm_to_vmem [thread:$0]  %s2, 1536, %s45, [#allocation6], 128, 128, 8
    $region13: #{tpu_custom_call.1} parent=1 // pred_fallthru
      _
    // Predicated region
    $region14: #{tpu_custom_call.1} parent=1 // pred_check
      _
    $region15: #{tpu_custom_call.1} parent=1 // pred_check_branch
      %52 = sbr.rel (0) target = $region17
    $region16: #{tpu_custom_call.1} parent=1 // pred_region
      _
    $region17: #{tpu_custom_call.1} parent=1 // pred_fallthru
      _
    // Predicated region
    $region18: #{tpu_custom_call.1} parent=1 // pred_check
      _
    $region19: #{tpu_custom_call.1} parent=1 // pred_check_branch
      %54 = sbr.rel (0) target = $region21
    $region20: #{tpu_custom_call.1} parent=1 // pred_region
      %s56 = ssub.s32 512, 512
      %57 = vsyncadd [#allocation9], %s56
      %s58 = sshll.u32 [#allocation8], 4
      %s59 = int_to_ptr.vmem [resolvable:$true] %s58
      %64 = dma.hbm_to_vmem [thread:$0]  %s4, 512, %s59, [#allocation9], 128, 128, 8
    $region21: #{tpu_custom_call.1} parent=1 // pred_fallthru
      _
    // Predicated region
    $region22: #{tpu_custom_call.1} parent=1 // pred_check
      _
    $region23: #{tpu_custom_call.1} parent=1 // pred_check_branch
      %66 = sbr.rel (0) target = $region25
    $region24: #{tpu_custom_call.1} parent=1 // pred_region
      _
    $region25: #{tpu_custom_call.1} parent=1 // pred_fallthru
      _
    // Predicated region
    $region26: #{tpu_custom_call.1} parent=1 // pred_check
      _
    $region27: #{tpu_custom_call.1} parent=1 // pred_check_branch
      %68 = sbr.rel (0) target = $region29
    $region28: #{tpu_custom_call.1} parent=1 // pred_region
      %69 = dma.done [#allocation3], 256
    $region29: #{tpu_custom_call.1} parent=1 // pred_fallthru
      _
    // Predicated region
    $region30: #{tpu_custom_call.1} parent=1 // pred_check
      _
    $region31: #{tpu_custom_call.1} parent=1 // pred_check_branch
      %71 = sbr.rel (0) target = $region33
    $region32: #{tpu_custom_call.1} parent=1 // pred_region
      %72 = dma.done [#allocation6], 1024
    $region33: #{tpu_custom_call.1} parent=1 // pred_fallthru
      _
    // Predicated region
    $region34: #{tpu_custom_call.1} parent=1 // pred_check
      _
    $region35: #{tpu_custom_call.1} parent=1 // pred_check_branch
      %74 = sbr.rel (0) target = $region37
    $region36: #{tpu_custom_call.1} parent=1 // pred_region
      %75 = dma.done [#allocation6], 1536
    $region37: #{tpu_custom_call.1} parent=1 // pred_fallthru
      _
    // Predicated region
    $region38: #{tpu_custom_call.1} parent=1 // pred_check
      _
    $region39: #{tpu_custom_call.1} parent=1 // pred_check_branch
      %77 = sbr.rel (0) target = $region41
    $region40: #{tpu_custom_call.1} parent=1 // pred_region
      %78 = dma.done [#allocation9], 512
    $region41: #{tpu_custom_call.1} parent=1 // pred_fallthru
      _
    %v79 = vld [vmem:[#allocation2] sm:$0xff]
    %v80 = vld [vmem:[#allocation2 + $0x8] sm:$0xff]
    %v81 = vld [vmem:[#allocation7] sm:$0xff]
    %v82 = vld [vmem:[#allocation7 + $0x8] sm:$0xff]
    %v83 = vld [vmem:[#allocation7 + $0x10] sm:$0xff]
    %v84 = vld [vmem:[#allocation7 + $0x18] sm:$0xff]
    %v85 = vld [vmem:[#allocation7 + $0x20] sm:$0xff]
    %v86 = vld [vmem:[#allocation7 + $0x28] sm:$0xff]
    %v87 = vld [vmem:[#allocation7 + $0x30] sm:$0xff]
    %v88 = vld [vmem:[#allocation7 + $0x38] sm:$0xff]
    %v89 = vld [vmem:[#allocation7 + $0x40] sm:$0xff]
    %v90 = vld [vmem:[#allocation7 + $0x48] sm:$0xff]
    %v91 = vld [vmem:[#allocation7 + $0x50] sm:$0xff]
    %v92 = vld [vmem:[#allocation7 + $0x58] sm:$0xff]
    %v93 = vld [vmem:[%s3] sm:$0x1]
    %v95 = vlaneseq
    %v96 = vshrl.u32 %v95, 7
    %v97 = vsub.s32 0, %v96
    %v98 = vrot.slane %v93, %v97
    %vm100 = vcmask 785408
    %v102 = vsel %vm100, %v79, 0
    %v105 = vsel %vm100, %v80, 0
    %107 = vmatprep.subr.mxu0 0.0
    %108 = vmatpush1.msra.mxu0 0.0
    %109 = vmatprep.subr.mxu0 0.0
    %110 = vmatpush1.msra.mxu0 0.0
    %111 = vmatprep.subr.mxu0 0.0
    %112 = vmatpush1.msra.mxu0 0.0
    %113 = vmatprep.subr.mxu0 0.0
    %114 = vmatpush1.msra.mxu0 0.0
    %115 = vmatprep.subr.mxu0 0.0
    %116 = vmatpush1.msra.mxu0 %v92
    %117 = vmatprep.subr.mxu0 0.0
    %118 = vmatpush1.msra.mxu0 %v91
    %119 = vmatprep.subr.mxu0 0.0
    %120 = vmatpush1.msra.mxu0 %v90
    %121 = vmatprep.subr.mxu0 0.0
    %122 = vmatpush1.msra.mxu0 %v89
    %123 = vmatprep.subr.mxu0 0.0
    %124 = vmatpush1.msra.mxu0 %v88
    %125 = vmatprep.subr.mxu0 0.0
    %126 = vmatpush1.msra.mxu0 %v87
    %127 = vmatprep.subr.mxu0 0.0
    %128 = vmatpush1.msra.mxu0 %v86
    %129 = vmatprep.subr.mxu0 0.0
    %130 = vmatpush1.msra.mxu0 %v85
    %131 = vmatprep.subr.mxu0 0.0
    %132 = vmatpush1.msra.mxu0 %v84
    %133 = vmatprep.subr.mxu0 0.0
    %134 = vmatpush1.msra.mxu0 %v83
    %135 = vmatprep.subr.mxu0 0.0
    %136 = vmatpush1.msra.mxu0 %v82
    %137 = vmatprep.subr.mxu0 0.0
    %138 = vmatpush1.msra.mxu0 %v81
    %139 = vmatprep.subr.mxu0 0.0
    %140 = vmatpush2.msra.mxu0 0.0
    %141 = vmatprep.subr.mxu0 0.0
    %142 = vmatpush2.msra.mxu0 0.0
    %143 = vmatprep.subr.mxu0 0.0
    %144 = vmatpush2.msra.mxu0 0.0
    %145 = vmatprep.subr.mxu0 0.0
    %146 = vmatpush2.msra.mxu0 0.0
    %147 = vmatprep.subr.mxu0 0.0
    %148 = vmatpush2.msra.mxu0 0.0
    %149 = vmatprep.subr.mxu0 0.0
    %150 = vmatpush2.msra.mxu0 0.0
    %151 = vmatprep.subr.mxu0 0.0
    %152 = vmatpush2.msra.mxu0 0.0
    %153 = vmatprep.subr.mxu0 0.0
    %154 = vmatpush2.msra.mxu0 0.0
    %155 = vmatprep.subr.mxu0 0.0
    %156 = vmatpush2.msra.mxu0 0.0
    %157 = vmatprep.subr.mxu0 0.0
    %158 = vmatpush2.msra.mxu0 0.0
    %159 = vmatprep.subr.mxu0 0.0
    %160 = vmatpush2.msra.mxu0 0.0
    %161 = vmatprep.subr.mxu0 0.0
    %162 = vmatpush2.msra.mxu0 0.0
    %163 = vmatprep.subr.mxu0 0.0
    %164 = vmatpush2.msra.mxu0 0.0
    %165 = vmatprep.subr.mxu0 0.0
    %166 = vmatpush2.msra.mxu0 0.0
    %167 = vmatprep.subr.mxu0 0.0
    %168 = vmatpush2.msra.mxu0 0.0
    %169 = vmatprep.subr.mxu0 0.0
    %170 = vmatpush2.msra.mxu0 0.0
    %171 = vmatprep.mubr.f32.mxu0 0.0
    %172 = vmatmul.mubr.f32.gmra.mxu0 %v102
    %v173 = vpop.f32.mrf.mxu0
    %v174 = vadd.f32 %v98, %v173
    %v175 = vpop.f32.mrf.mxu0
    %176 = vmatprep.mubr.f32.mxu0 0.0
    %177 = vmatmul.mubr.f32.gmra.mxu0 %v105
    %v178 = vpop.f32.mrf.mxu0
    %v179 = vadd.f32 %v98, %v178
    %v180 = vpop.f32.mrf.mxu0
    %181 = vdwg.mxu0
    %184 = vrot.lane.b32.xlu0 %v174, 120
    %v185 = vpop.permute.xlu0 %184
    %186 = vrot.lane.b32.xlu0 %v179, 120
    %v187 = vpop.permute.xlu0 %186
    %188 = vrot.lane.b32.xlu0 %v174, 112
    %v189 = vpop.permute.xlu0 %188
    %190 = vrot.lane.b32.xlu0 %v179, 112
    %v191 = vpop.permute.xlu0 %190
    %192 = vrot.lane.b32.xlu0 %v174, 104
    %v193 = vpop.permute.xlu0 %192
    %194 = vrot.lane.b32.xlu0 %v179, 104
    %v195 = vpop.permute.xlu0 %194
    %v196 = vld [vmem:[#allocation5] sm:$0xff]
    %v197 = vld [vmem:[#allocation5 + $0x8] sm:$0xff]
    %v198 = vld [vmem:[#allocation5 + $0x10] sm:$0xff]
    %v199 = vld [vmem:[#allocation5 + $0x18] sm:$0xff]
    %v200 = vld [vmem:[#allocation5 + $0x20] sm:$0xff]
    %v201 = vld [vmem:[#allocation5 + $0x28] sm:$0xff]
    %v202 = vld [vmem:[#allocation5 + $0x30] sm:$0xff]
    %v203 = vld [vmem:[#allocation5 + $0x38] sm:$0xff]
    %204 = vrot.lane.b32.xlu0 %v174, 96
    %v205 = vpop.permute.xlu0 %204
    %vm206 = vcmask 64512
    %v207 = vsel %vm206, %v174, 0
    %v209 = vsel %vm206, %v205, 0
    %211 = vmatprep.subr.mxu0 0.0
    %212 = vmatpush1.xpose.msra.mxu0 0.0
    %213 = vmatprep.subr.mxu0 0.0
    %214 = vmatpush1.xpose.msra.mxu0 0.0
    %215 = vmatprep.subr.mxu0 0.0
    %216 = vmatpush1.xpose.msra.mxu0 0.0
    %217 = vmatprep.subr.mxu0 0.0
    %218 = vmatpush1.xpose.msra.mxu0 0.0
    %219 = vmatprep.subr.mxu0 0.0
    %220 = vmatpush1.xpose.msra.mxu0 0.0
    %221 = vmatprep.subr.mxu0 0.0
    %222 = vmatpush1.xpose.msra.mxu0 0.0
    %223 = vmatprep.subr.mxu0 0.0
    %224 = vmatpush1.xpose.msra.mxu0 0.0
    %225 = vmatprep.subr.mxu0 0.0
    %226 = vmatpush1.xpose.msra.mxu0 0.0
    %227 = vmatprep.subr.mxu0 0.0
    %228 = vmatpush1.xpose.msra.mxu0 0.0
    %229 = vmatprep.subr.mxu0 0.0
    %230 = vmatpush1.xpose.msra.mxu0 0.0
    %231 = vmatprep.subr.mxu0 0.0
    %232 = vmatpush1.xpose.msra.mxu0 0.0
    %233 = vmatprep.subr.mxu0 0.0
    %234 = vmatpush1.xpose.msra.mxu0 0.0
    %235 = vmatprep.subr.mxu0 0.0
    %236 = vmatpush1.xpose.msra.mxu0 0.0
    %237 = vmatprep.subr.mxu0 0.0
    %238 = vmatpush1.xpose.msra.mxu0 0.0
    %239 = vmatprep.subr.mxu0 0.0
    %240 = vmatpush1.xpose.msra.mxu0 0.0
    %241 = vmatprep.subr.mxu0 0.0
    %242 = vmatpush1.xpose.msra.mxu0 %v209
    %243 = vmatprep.subr.mxu0 0.0
    %244 = vmatpush2.xpose.msra.mxu0 0.0
    %245 = vmatprep.subr.mxu0 0.0
    %246 = vmatpush2.xpose.msra.mxu0 0.0
    %247 = vmatprep.subr.mxu0 0.0
    %248 = vmatpush2.xpose.msra.mxu0 0.0
    %249 = vmatprep.subr.mxu0 0.0
    %250 = vmatpush2.xpose.msra.mxu0 0.0
    %251 = vmatprep.subr.mxu0 0.0
    %252 = vmatpush2.xpose.msra.mxu0 0.0
    %253 = vmatprep.subr.mxu0 0.0
    %254 = vmatpush2.xpose.msra.mxu0 0.0
    %255 = vmatprep.subr.mxu0 0.0
    %256 = vmatpush2.xpose.msra.mxu0 0.0
    %257 = vmatprep.subr.mxu0 0.0
    %258 = vmatpush2.xpose.msra.mxu0 0.0
    %259 = vmatprep.subr.mxu0 0.0
    %260 = vmatpush2.xpose.msra.mxu0 0.0
    %261 = vmatprep.subr.mxu0 0.0
    %262 = vmatpush2.xpose.msra.mxu0 0.0
    %263 = vmatprep.subr.mxu0 0.0
    %264 = vmatpush2.xpose.msra.mxu0 0.0
    %265 = vmatprep.subr.mxu0 0.0
    %266 = vmatpush2.xpose.msra.mxu0 0.0
    %267 = vmatprep.subr.mxu0 0.0
    %268 = vmatpush2.xpose.msra.mxu0 0.0
    %269 = vmatprep.subr.mxu0 0.0
    %270 = vmatpush2.xpose.msra.mxu0 0.0
    %271 = vmatprep.subr.mxu0 0.0
    %272 = vmatpush2.xpose.msra.mxu0 0.0
    %273 = vmatprep.subr.mxu0 0.0
    %274 = vmatpush2.xpose.msra.mxu0 0.0
    %275 = vmatprep.mubr.f32.mxu0 0.0
    %276 = vmatmul.mubr.f32.gmra.mxu0 %v207
    %v277 = vpop.f32.mrf.mxu0
    %v278 = vadd.f32 %v196, %v277
    %v279 = vpop.f32.mrf.mxu0
    %280 = vdwg.mxu0
    %281 = vrot.lane.b32.xlu0 %v185, 96
    %v282 = vpop.permute.xlu0 %281
    %v283 = vsel %vm206, %v185, 0
    %v285 = vsel %vm206, %v282, 0
    %287 = vmatprep.subr.mxu0 0.0
    %288 = vmatpush1.xpose.msra.mxu0 0.0
    %289 = vmatprep.subr.mxu0 0.0
    %290 = vmatpush1.xpose.msra.mxu0 0.0
    %291 = vmatprep.subr.mxu0 0.0
    %292 = vmatpush1.xpose.msra.mxu0 0.0
    %293 = vmatprep.subr.mxu0 0.0
    %294 = vmatpush1.xpose.msra.mxu0 0.0
    %295 = vmatprep.subr.mxu0 0.0
    %296 = vmatpush1.xpose.msra.mxu0 0.0
    %297 = vmatprep.subr.mxu0 0.0
    %298 = vmatpush1.xpose.msra.mxu0 0.0
    %299 = vmatprep.subr.mxu0 0.0
    %300 = vmatpush1.xpose.msra.mxu0 0.0
    %301 = vmatprep.subr.mxu0 0.0
    %302 = vmatpush1.xpose.msra.mxu0 0.0
    %303 = vmatprep.subr.mxu0 0.0
    %304 = vmatpush1.xpose.msra.mxu0 0.0
    %305 = vmatprep.subr.mxu0 0.0
    %306 = vmatpush1.xpose.msra.mxu0 0.0
    %307 = vmatprep.subr.mxu0 0.0
    %308 = vmatpush1.xpose.msra.mxu0 0.0
    %309 = vmatprep.subr.mxu0 0.0
    %310 = vmatpush1.xpose.msra.mxu0 0.0
    %311 = vmatprep.subr.mxu0 0.0
    %312 = vmatpush1.xpose.msra.mxu0 0.0
    %313 = vmatprep.subr.mxu0 0.0
    %314 = vmatpush1.xpose.msra.mxu0 0.0
    %315 = vmatprep.subr.mxu0 0.0
    %316 = vmatpush1.xpose.msra.mxu0 0.0
    %317 = vmatprep.subr.mxu0 0.0
    %318 = vmatpush1.xpose.msra.mxu0 %v285
    %319 = vmatprep.subr.mxu0 0.0
    %320 = vmatpush2.xpose.msra.mxu0 0.0
    %321 = vmatprep.subr.mxu0 0.0
    %322 = vmatpush2.xpose.msra.mxu0 0.0
    %323 = vmatprep.subr.mxu0 0.0
    %324 = vmatpush2.xpose.msra.mxu0 0.0
    %325 = vmatprep.subr.mxu0 0.0
    %326 = vmatpush2.xpose.msra.mxu0 0.0
    %327 = vmatprep.subr.mxu0 0.0
    %328 = vmatpush2.xpose.msra.mxu0 0.0
    %329 = vmatprep.subr.mxu0 0.0
    %330 = vmatpush2.xpose.msra.mxu0 0.0
    %331 = vmatprep.subr.mxu0 0.0
    %332 = vmatpush2.xpose.msra.mxu0 0.0
    %333 = vmatprep.subr.mxu0 0.0
    %334 = vmatpush2.xpose.msra.mxu0 0.0
    %335 = vmatprep.subr.mxu0 0.0
    %336 = vmatpush2.xpose.msra.mxu0 0.0
    %337 = vmatprep.subr.mxu0 0.0
    %338 = vmatpush2.xpose.msra.mxu0 0.0
    %339 = vmatprep.subr.mxu0 0.0
    %340 = vmatpush2.xpose.msra.mxu0 0.0
    %341 = vmatprep.subr.mxu0 0.0
    %342 = vmatpush2.xpose.msra.mxu0 0.0
    %343 = vmatprep.subr.mxu0 0.0
    %344 = vmatpush2.xpose.msra.mxu0 0.0
    %345 = vmatprep.subr.mxu0 0.0
    %346 = vmatpush2.xpose.msra.mxu0 0.0
    %347 = vmatprep.subr.mxu0 0.0
    %348 = vmatpush2.xpose.msra.mxu0 0.0
    %349 = vmatprep.subr.mxu0 0.0
    %350 = vmatpush2.xpose.msra.mxu0 0.0
    %351 = vmatprep.mubr.f32.mxu0 0.0
    %352 = vmatmul.mubr.f32.gmra.mxu0 %v283
    %v353 = vpop.f32.mrf.mxu0
    %v354 = vadd.f32 %v197, %v353
    %v355 = vpop.f32.mrf.mxu0
    %356 = vdwg.mxu0
    %357 = vrot.lane.b32.xlu0 %v189, 96
    %v358 = vpop.permute.xlu0 %357
    %v359 = vsel %vm206, %v189, 0
    %v361 = vsel %vm206, %v358, 0
    %363 = vmatprep.subr.mxu0 0.0
    %364 = vmatpush1.xpose.msra.mxu0 0.0
    %365 = vmatprep.subr.mxu0 0.0
    %366 = vmatpush1.xpose.msra.mxu0 0.0
    %367 = vmatprep.subr.mxu0 0.0
    %368 = vmatpush1.xpose.msra.mxu0 0.0
    %369 = vmatprep.subr.mxu0 0.0
    %370 = vmatpush1.xpose.msra.mxu0 0.0
    %371 = vmatprep.subr.mxu0 0.0
    %372 = vmatpush1.xpose.msra.mxu0 0.0
    %373 = vmatprep.subr.mxu0 0.0
    %374 = vmatpush1.xpose.msra.mxu0 0.0
    %375 = vmatprep.subr.mxu0 0.0
    %376 = vmatpush1.xpose.msra.mxu0 0.0
    %377 = vmatprep.subr.mxu0 0.0
    %378 = vmatpush1.xpose.msra.mxu0 0.0
    %379 = vmatprep.subr.mxu0 0.0
    %380 = vmatpush1.xpose.msra.mxu0 0.0
    %381 = vmatprep.subr.mxu0 0.0
    %382 = vmatpush1.xpose.msra.mxu0 0.0
    %383 = vmatprep.subr.mxu0 0.0
    %384 = vmatpush1.xpose.msra.mxu0 0.0
    %385 = vmatprep.subr.mxu0 0.0
    %386 = vmatpush1.xpose.msra.mxu0 0.0
    %387 = vmatprep.subr.mxu0 0.0
    %388 = vmatpush1.xpose.msra.mxu0 0.0
    %389 = vmatprep.subr.mxu0 0.0
    %390 = vmatpush1.xpose.msra.mxu0 0.0
    %391 = vmatprep.subr.mxu0 0.0
    %392 = vmatpush1.xpose.msra.mxu0 0.0
    %393 = vmatprep.subr.mxu0 0.0
    %394 = vmatpush1.xpose.msra.mxu0 %v361
    %395 = vmatprep.subr.mxu0 0.0
    %396 = vmatpush2.xpose.msra.mxu0 0.0
    %397 = vmatprep.subr.mxu0 0.0
    %398 = vmatpush2.xpose.msra.mxu0 0.0
    %399 = vmatprep.subr.mxu0 0.0
    %400 = vmatpush2.xpose.msra.mxu0 0.0
    %401 = vmatprep.subr.mxu0 0.0
    %402 = vmatpush2.xpose.msra.mxu0 0.0
    %403 = vmatprep.subr.mxu0 0.0
    %404 = vmatpush2.xpose.msra.mxu0 0.0
    %405 = vmatprep.subr.mxu0 0.0
    %406 = vmatpush2.xpose.msra.mxu0 0.0
    %407 = vmatprep.subr.mxu0 0.0
    %408 = vmatpush2.xpose.msra.mxu0 0.0
    %409 = vmatprep.subr.mxu0 0.0
    %410 = vmatpush2.xpose.msra.mxu0 0.0
    %411 = vmatprep.subr.mxu0 0.0
    %412 = vmatpush2.xpose.msra.mxu0 0.0
    %413 = vmatprep.subr.mxu0 0.0
    %414 = vmatpush2.xpose.msra.mxu0 0.0
    %415 = vmatprep.subr.mxu0 0.0
    %416 = vmatpush2.xpose.msra.mxu0 0.0
    %417 = vmatprep.subr.mxu0 0.0
    %418 = vmatpush2.xpose.msra.mxu0 0.0
    %419 = vmatprep.subr.mxu0 0.0
    %420 = vmatpush2.xpose.msra.mxu0 0.0
    %421 = vmatprep.subr.mxu0 0.0
    %422 = vmatpush2.xpose.msra.mxu0 0.0
    %423 = vmatprep.subr.mxu0 0.0
    %424 = vmatpush2.xpose.msra.mxu0 0.0
    %425 = vmatprep.subr.mxu0 0.0
    %426 = vmatpush2.xpose.msra.mxu0 0.0
    %427 = vmatprep.mubr.f32.mxu0 0.0
    %428 = vmatmul.mubr.f32.gmra.mxu0 %v359
    %v429 = vpop.f32.mrf.mxu0
    %v430 = vadd.f32 %v198, %v429
    %v431 = vpop.f32.mrf.mxu0
    %432 = vdwg.mxu0
    %433 = vrot.lane.b32.xlu0 %v193, 96
    %v434 = vpop.permute.xlu0 %433
    %v435 = vsel %vm206, %v193, 0
    %v437 = vsel %vm206, %v434, 0
    %439 = vmatprep.subr.mxu0 0.0
    %440 = vmatpush1.xpose.msra.mxu0 0.0
    %441 = vmatprep.subr.mxu0 0.0
    %442 = vmatpush1.xpose.msra.mxu0 0.0
    %443 = vmatprep.subr.mxu0 0.0
    %444 = vmatpush1.xpose.msra.mxu0 0.0
    %445 = vmatprep.subr.mxu0 0.0
    %446 = vmatpush1.xpose.msra.mxu0 0.0
    %447 = vmatprep.subr.mxu0 0.0
    %448 = vmatpush1.xpose.msra.mxu0 0.0
    %449 = vmatprep.subr.mxu0 0.0
    %450 = vmatpush1.xpose.msra.mxu0 0.0
    %451 = vmatprep.subr.mxu0 0.0
    %452 = vmatpush1.xpose.msra.mxu0 0.0
    %453 = vmatprep.subr.mxu0 0.0
    %454 = vmatpush1.xpose.msra.mxu0 0.0
    %455 = vmatprep.subr.mxu0 0.0
    %456 = vmatpush1.xpose.msra.mxu0 0.0
    %457 = vmatprep.subr.mxu0 0.0
    %458 = vmatpush1.xpose.msra.mxu0 0.0
    %459 = vmatprep.subr.mxu0 0.0
    %460 = vmatpush1.xpose.msra.mxu0 0.0
    %461 = vmatprep.subr.mxu0 0.0
    %462 = vmatpush1.xpose.msra.mxu0 0.0
    %463 = vmatprep.subr.mxu0 0.0
    %464 = vmatpush1.xpose.msra.mxu0 0.0
    %465 = vmatprep.subr.mxu0 0.0
    %466 = vmatpush1.xpose.msra.mxu0 0.0
    %467 = vmatprep.subr.mxu0 0.0
    %468 = vmatpush1.xpose.msra.mxu0 0.0
    %469 = vmatprep.subr.mxu0 0.0
    %470 = vmatpush1.xpose.msra.mxu0 %v437
    %471 = vmatprep.subr.mxu0 0.0
    %472 = vmatpush2.xpose.msra.mxu0 0.0
    %473 = vmatprep.subr.mxu0 0.0
    %474 = vmatpush2.xpose.msra.mxu0 0.0
    %475 = vmatprep.subr.mxu0 0.0
    %476 = vmatpush2.xpose.msra.mxu0 0.0
    %477 = vmatprep.subr.mxu0 0.0
    %478 = vmatpush2.xpose.msra.mxu0 0.0
    %479 = vmatprep.subr.mxu0 0.0
    %480 = vmatpush2.xpose.msra.mxu0 0.0
    %481 = vmatprep.subr.mxu0 0.0
    %482 = vmatpush2.xpose.msra.mxu0 0.0
    %483 = vmatprep.subr.mxu0 0.0
    %484 = vmatpush2.xpose.msra.mxu0 0.0
    %485 = vmatprep.subr.mxu0 0.0
    %486 = vmatpush2.xpose.msra.mxu0 0.0
    %487 = vmatprep.subr.mxu0 0.0
    %488 = vmatpush2.xpose.msra.mxu0 0.0
    %489 = vmatprep.subr.mxu0 0.0
    %490 = vmatpush2.xpose.msra.mxu0 0.0
    %491 = vmatprep.subr.mxu0 0.0
    %492 = vmatpush2.xpose.msra.mxu0 0.0
    %493 = vmatprep.subr.mxu0 0.0
    %494 = vmatpush2.xpose.msra.mxu0 0.0
    %495 = vmatprep.subr.mxu0 0.0
    %496 = vmatpush2.xpose.msra.mxu0 0.0
    %497 = vmatprep.subr.mxu0 0.0
    %498 = vmatpush2.xpose.msra.mxu0 0.0
    %499 = vmatprep.subr.mxu0 0.0
    %500 = vmatpush2.xpose.msra.mxu0 0.0
    %501 = vmatprep.subr.mxu0 0.0
    %502 = vmatpush2.xpose.msra.mxu0 0.0
    %503 = vmatprep.mubr.f32.mxu0 0.0
    %504 = vmatmul.mubr.f32.gmra.mxu0 %v435
    %v505 = vpop.f32.mrf.mxu0
    %v506 = vadd.f32 %v199, %v505
    %v507 = vpop.f32.mrf.mxu0
    %508 = vdwg.mxu0
    %509 = vrot.lane.b32.xlu0 %v179, 96
    %v510 = vpop.permute.xlu0 %509
    %v511 = vsel %vm206, %v179, 0
    %v513 = vsel %vm206, %v510, 0
    %515 = vmatprep.subr.mxu0 0.0
    %516 = vmatpush1.xpose.msra.mxu0 0.0
    %517 = vmatprep.subr.mxu0 0.0
    %518 = vmatpush1.xpose.msra.mxu0 0.0
    %519 = vmatprep.subr.mxu0 0.0
    %520 = vmatpush1.xpose.msra.mxu0 0.0
    %521 = vmatprep.subr.mxu0 0.0
    %522 = vmatpush1.xpose.msra.mxu0 0.0
    %523 = vmatprep.subr.mxu0 0.0
    %524 = vmatpush1.xpose.msra.mxu0 0.0
    %525 = vmatprep.subr.mxu0 0.0
    %526 = vmatpush1.xpose.msra.mxu0 0.0
    %527 = vmatprep.subr.mxu0 0.0
    %528 = vmatpush1.xpose.msra.mxu0 0.0
    %529 = vmatprep.subr.mxu0 0.0
    %530 = vmatpush1.xpose.msra.mxu0 0.0
    %531 = vmatprep.subr.mxu0 0.0
    %532 = vmatpush1.xpose.msra.mxu0 0.0
    %533 = vmatprep.subr.mxu0 0.0
    %534 = vmatpush1.xpose.msra.mxu0 0.0
    %535 = vmatprep.subr.mxu0 0.0
    %536 = vmatpush1.xpose.msra.mxu0 0.0
    %537 = vmatprep.subr.mxu0 0.0
    %538 = vmatpush1.xpose.msra.mxu0 0.0
    %539 = vmatprep.subr.mxu0 0.0
    %540 = vmatpush1.xpose.msra.mxu0 0.0
    %541 = vmatprep.subr.mxu0 0.0
    %542 = vmatpush1.xpose.msra.mxu0 0.0
    %543 = vmatprep.subr.mxu0 0.0
    %544 = vmatpush1.xpose.msra.mxu0 0.0
    %545 = vmatprep.subr.mxu0 0.0
    %546 = vmatpush1.xpose.msra.mxu0 %v513
    %547 = vmatprep.subr.mxu0 0.0
    %548 = vmatpush2.xpose.msra.mxu0 0.0
    %549 = vmatprep.subr.mxu0 0.0
    %550 = vmatpush2.xpose.msra.mxu0 0.0
    %551 = vmatprep.subr.mxu0 0.0
    %552 = vmatpush2.xpose.msra.mxu0 0.0
    %553 = vmatprep.subr.mxu0 0.0
    %554 = vmatpush2.xpose.msra.mxu0 0.0
    %555 = vmatprep.subr.mxu0 0.0
    %556 = vmatpush2.xpose.msra.mxu0 0.0
    %557 = vmatprep.subr.mxu0 0.0
    %558 = vmatpush2.xpose.msra.mxu0 0.0
    %559 = vmatprep.subr.mxu0 0.0
    %560 = vmatpush2.xpose.msra.mxu0 0.0
    %561 = vmatprep.subr.mxu0 0.0
    %562 = vmatpush2.xpose.msra.mxu0 0.0
    %563 = vmatprep.subr.mxu0 0.0
    %564 = vmatpush2.xpose.msra.mxu0 0.0
    %565 = vmatprep.subr.mxu0 0.0
    %566 = vmatpush2.xpose.msra.mxu0 0.0
    %567 = vmatprep.subr.mxu0 0.0
    %568 = vmatpush2.xpose.msra.mxu0 0.0
    %569 = vmatprep.subr.mxu0 0.0
    %570 = vmatpush2.xpose.msra.mxu0 0.0
    %571 = vmatprep.subr.mxu0 0.0
    %572 = vmatpush2.xpose.msra.mxu0 0.0
    %573 = vmatprep.subr.mxu0 0.0
    %574 = vmatpush2.xpose.msra.mxu0 0.0
    %575 = vmatprep.subr.mxu0 0.0
    %576 = vmatpush2.xpose.msra.mxu0 0.0
    %577 = vmatprep.subr.mxu0 0.0
    %578 = vmatpush2.xpose.msra.mxu0 0.0
    %579 = vmatprep.mubr.f32.mxu0 0.0
    %580 = vmatmul.mubr.f32.gmra.mxu0 %v511
    %v581 = vpop.f32.mrf.mxu0
    %v582 = vadd.f32 %v200, %v581
    %v583 = vpop.f32.mrf.mxu0
    %584 = vdwg.mxu0
    %585 = vrot.lane.b32.xlu0 %v187, 96
    %v586 = vpop.permute.xlu0 %585
    %v587 = vsel %vm206, %v187, 0
    %v589 = vsel %vm206, %v586, 0
    %591 = vmatprep.subr.mxu0 0.0
    %592 = vmatpush1.xpose.msra.mxu0 0.0
    %593 = vmatprep.subr.mxu0 0.0
    %594 = vmatpush1.xpose.msra.mxu0 0.0
    %595 = vmatprep.subr.mxu0 0.0
    %596 = vmatpush1.xpose.msra.mxu0 0.0
    %597 = vmatprep.subr.mxu0 0.0
    %598 = vmatpush1.xpose.msra.mxu0 0.0
    %599 = vmatprep.subr.mxu0 0.0
    %600 = vmatpush1.xpose.msra.mxu0 0.0
    %601 = vmatprep.subr.mxu0 0.0
    %602 = vmatpush1.xpose.msra.mxu0 0.0
    %603 = vmatprep.subr.mxu0 0.0
    %604 = vmatpush1.xpose.msra.mxu0 0.0
    %605 = vmatprep.subr.mxu0 0.0
    %606 = vmatpush1.xpose.msra.mxu0 0.0
    %607 = vmatprep.subr.mxu0 0.0
    %608 = vmatpush1.xpose.msra.mxu0 0.0
    %609 = vmatprep.subr.mxu0 0.0
    %610 = vmatpush1.xpose.msra.mxu0 0.0
    %611 = vmatprep.subr.mxu0 0.0
    %612 = vmatpush1.xpose.msra.mxu0 0.0
    %613 = vmatprep.subr.mxu0 0.0
    %614 = vmatpush1.xpose.msra.mxu0 0.0
    %615 = vmatprep.subr.mxu0 0.0
    %616 = vmatpush1.xpose.msra.mxu0 0.0
    %617 = vmatprep.subr.mxu0 0.0
    %618 = vmatpush1.xpose.msra.mxu0 0.0
    %619 = vmatprep.subr.mxu0 0.0
    %620 = vmatpush1.xpose.msra.mxu0 0.0
    %621 = vmatprep.subr.mxu0 0.0
    %622 = vmatpush1.xpose.msra.mxu0 %v589
    %623 = vmatprep.subr.mxu0 0.0
    %624 = vmatpush2.xpose.msra.mxu0 0.0
    %625 = vmatprep.subr.mxu0 0.0
    %626 = vmatpush2.xpose.msra.mxu0 0.0
    %627 = vmatprep.subr.mxu0 0.0
    %628 = vmatpush2.xpose.msra.mxu0 0.0
    %629 = vmatprep.subr.mxu0 0.0
    %630 = vmatpush2.xpose.msra.mxu0 0.0
    %631 = vmatprep.subr.mxu0 0.0
    %632 = vmatpush2.xpose.msra.mxu0 0.0
    %633 = vmatprep.subr.mxu0 0.0
    %634 = vmatpush2.xpose.msra.mxu0 0.0
    %635 = vmatprep.subr.mxu0 0.0
    %636 = vmatpush2.xpose.msra.mxu0 0.0
    %637 = vmatprep.subr.mxu0 0.0
    %638 = vmatpush2.xpose.msra.mxu0 0.0
    %639 = vmatprep.subr.mxu0 0.0
    %640 = vmatpush2.xpose.msra.mxu0 0.0
    %641 = vmatprep.subr.mxu0 0.0
    %642 = vmatpush2.xpose.msra.mxu0 0.0
    %643 = vmatprep.subr.mxu0 0.0
    %644 = vmatpush2.xpose.msra.mxu0 0.0
    %645 = vmatprep.subr.mxu0 0.0
    %646 = vmatpush2.xpose.msra.mxu0 0.0
    %647 = vmatprep.subr.mxu0 0.0
    %648 = vmatpush2.xpose.msra.mxu0 0.0
    %649 = vmatprep.subr.mxu0 0.0
    %650 = vmatpush2.xpose.msra.mxu0 0.0
    %651 = vmatprep.subr.mxu0 0.0
    %652 = vmatpush2.xpose.msra.mxu0 0.0
    %653 = vmatprep.subr.mxu0 0.0
    %654 = vmatpush2.xpose.msra.mxu0 0.0
    %655 = vmatprep.mubr.f32.mxu0 0.0
    %656 = vmatmul.mubr.f32.gmra.mxu0 %v587
    %v657 = vpop.f32.mrf.mxu0
    %v658 = vadd.f32 %v201, %v657
    %v659 = vpop.f32.mrf.mxu0
    %660 = vdwg.mxu0
    %661 = vrot.lane.b32.xlu0 %v191, 96
    %v662 = vpop.permute.xlu0 %661
    %v663 = vsel %vm206, %v191, 0
    %v665 = vsel %vm206, %v662, 0
    %667 = vmatprep.subr.mxu0 0.0
    %668 = vmatpush1.xpose.msra.mxu0 0.0
    %669 = vmatprep.subr.mxu0 0.0
    %670 = vmatpush1.xpose.msra.mxu0 0.0
    %671 = vmatprep.subr.mxu0 0.0
    %672 = vmatpush1.xpose.msra.mxu0 0.0
    %673 = vmatprep.subr.mxu0 0.0
    %674 = vmatpush1.xpose.msra.mxu0 0.0
    %675 = vmatprep.subr.mxu0 0.0
    %676 = vmatpush1.xpose.msra.mxu0 0.0
    %677 = vmatprep.subr.mxu0 0.0
    %678 = vmatpush1.xpose.msra.mxu0 0.0
    %679 = vmatprep.subr.mxu0 0.0
    %680 = vmatpush1.xpose.msra.mxu0 0.0
    %681 = vmatprep.subr.mxu0 0.0
    %682 = vmatpush1.xpose.msra.mxu0 0.0
    %683 = vmatprep.subr.mxu0 0.0
    %684 = vmatpush1.xpose.msra.mxu0 0.0
    %685 = vmatprep.subr.mxu0 0.0
    %686 = vmatpush1.xpose.msra.mxu0 0.0
    %687 = vmatprep.subr.mxu0 0.0
    %688 = vmatpush1.xpose.msra.mxu0 0.0
    %689 = vmatprep.subr.mxu0 0.0
    %690 = vmatpush1.xpose.msra.mxu0 0.0
    %691 = vmatprep.subr.mxu0 0.0
    %692 = vmatpush1.xpose.msra.mxu0 0.0
    %693 = vmatprep.subr.mxu0 0.0
    %694 = vmatpush1.xpose.msra.mxu0 0.0
    %695 = vmatprep.subr.mxu0 0.0
    %696 = vmatpush1.xpose.msra.mxu0 0.0
    %697 = vmatprep.subr.mxu0 0.0
    %698 = vmatpush1.xpose.msra.mxu0 %v665
    %699 = vmatprep.subr.mxu0 0.0
    %700 = vmatpush2.xpose.msra.mxu0 0.0
    %701 = vmatprep.subr.mxu0 0.0
    %702 = vmatpush2.xpose.msra.mxu0 0.0
    %703 = vmatprep.subr.mxu0 0.0
    %704 = vmatpush2.xpose.msra.mxu0 0.0
    %705 = vmatprep.subr.mxu0 0.0
    %706 = vmatpush2.xpose.msra.mxu0 0.0
    %707 = vmatprep.subr.mxu0 0.0
    %708 = vmatpush2.xpose.msra.mxu0 0.0
    %709 = vmatprep.subr.mxu0 0.0
    %710 = vmatpush2.xpose.msra.mxu0 0.0
    %711 = vmatprep.subr.mxu0 0.0
    %712 = vmatpush2.xpose.msra.mxu0 0.0
    %713 = vmatprep.subr.mxu0 0.0
    %714 = vmatpush2.xpose.msra.mxu0 0.0
    %715 = vmatprep.subr.mxu0 0.0
    %716 = vmatpush2.xpose.msra.mxu0 0.0
    %717 = vmatprep.subr.mxu0 0.0
    %718 = vmatpush2.xpose.msra.mxu0 0.0
    %719 = vmatprep.subr.mxu0 0.0
    %720 = vmatpush2.xpose.msra.mxu0 0.0
    %721 = vmatprep.subr.mxu0 0.0
    %722 = vmatpush2.xpose.msra.mxu0 0.0
    %723 = vmatprep.subr.mxu0 0.0
    %724 = vmatpush2.xpose.msra.mxu0 0.0
    %725 = vmatprep.subr.mxu0 0.0
    %726 = vmatpush2.xpose.msra.mxu0 0.0
    %727 = vmatprep.subr.mxu0 0.0
    %728 = vmatpush2.xpose.msra.mxu0 0.0
    %729 = vmatprep.subr.mxu0 0.0
    %730 = vmatpush2.xpose.msra.mxu0 0.0
    %731 = vmatprep.mubr.f32.mxu0 0.0
    %732 = vmatmul.mubr.f32.gmra.mxu0 %v663
    %v733 = vpop.f32.mrf.mxu0
    %v734 = vadd.f32 %v202, %v733
    %v735 = vpop.f32.mrf.mxu0
    %736 = vdwg.mxu0
    %737 = vrot.lane.b32.xlu0 %v195, 96
    %v738 = vpop.permute.xlu0 %737
    %v739 = vsel %vm206, %v195, 0
    %v741 = vsel %vm206, %v738, 0
    %743 = vmatprep.subr.mxu0 0.0
    %744 = vmatpush1.xpose.msra.mxu0 0.0
    %745 = vmatprep.subr.mxu0 0.0
    %746 = vmatpush1.xpose.msra.mxu0 0.0
    %747 = vmatprep.subr.mxu0 0.0
    %748 = vmatpush1.xpose.msra.mxu0 0.0
    %749 = vmatprep.subr.mxu0 0.0
    %750 = vmatpush1.xpose.msra.mxu0 0.0
    %751 = vmatprep.subr.mxu0 0.0
    %752 = vmatpush1.xpose.msra.mxu0 0.0
    %753 = vmatprep.subr.mxu0 0.0
    %754 = vmatpush1.xpose.msra.mxu0 0.0
    %755 = vmatprep.subr.mxu0 0.0
    %756 = vmatpush1.xpose.msra.mxu0 0.0
    %757 = vmatprep.subr.mxu0 0.0
    %758 = vmatpush1.xpose.msra.mxu0 0.0
    %759 = vmatprep.subr.mxu0 0.0
    %760 = vmatpush1.xpose.msra.mxu0 0.0
    %761 = vmatprep.subr.mxu0 0.0
    %762 = vmatpush1.xpose.msra.mxu0 0.0
    %763 = vmatprep.subr.mxu0 0.0
    %764 = vmatpush1.xpose.msra.mxu0 0.0
    %765 = vmatprep.subr.mxu0 0.0
    %766 = vmatpush1.xpose.msra.mxu0 0.0
    %767 = vmatprep.subr.mxu0 0.0
    %768 = vmatpush1.xpose.msra.mxu0 0.0
    %769 = vmatprep.subr.mxu0 0.0
    %770 = vmatpush1.xpose.msra.mxu0 0.0
    %771 = vmatprep.subr.mxu0 0.0
    %772 = vmatpush1.xpose.msra.mxu0 0.0
    %773 = vmatprep.subr.mxu0 0.0
    %774 = vmatpush1.xpose.msra.mxu0 %v741
    %775 = vmatprep.subr.mxu0 0.0
    %776 = vmatpush2.xpose.msra.mxu0 0.0
    %777 = vmatprep.subr.mxu0 0.0
    %778 = vmatpush2.xpose.msra.mxu0 0.0
    %779 = vmatprep.subr.mxu0 0.0
    %780 = vmatpush2.xpose.msra.mxu0 0.0
    %781 = vmatprep.subr.mxu0 0.0
    %782 = vmatpush2.xpose.msra.mxu0 0.0
    %783 = vmatprep.subr.mxu0 0.0
    %784 = vmatpush2.xpose.msra.mxu0 0.0
    %785 = vmatprep.subr.mxu0 0.0
    %786 = vmatpush2.xpose.msra.mxu0 0.0
    %787 = vmatprep.subr.mxu0 0.0
    %788 = vmatpush2.xpose.msra.mxu0 0.0
    %789 = vmatprep.subr.mxu0 0.0
    %790 = vmatpush2.xpose.msra.mxu0 0.0
    %791 = vmatprep.subr.mxu0 0.0
    %792 = vmatpush2.xpose.msra.mxu0 0.0
    %793 = vmatprep.subr.mxu0 0.0
    %794 = vmatpush2.xpose.msra.mxu0 0.0
    %795 = vmatprep.subr.mxu0 0.0
    %796 = vmatpush2.xpose.msra.mxu0 0.0
    %797 = vmatprep.subr.mxu0 0.0
    %798 = vmatpush2.xpose.msra.mxu0 0.0
    %799 = vmatprep.subr.mxu0 0.0
    %800 = vmatpush2.xpose.msra.mxu0 0.0
    %801 = vmatprep.subr.mxu0 0.0
    %802 = vmatpush2.xpose.msra.mxu0 0.0
    %803 = vmatprep.subr.mxu0 0.0
    %804 = vmatpush2.xpose.msra.mxu0 0.0
    %805 = vmatprep.subr.mxu0 0.0
    %806 = vmatpush2.xpose.msra.mxu0 0.0
    %807 = vmatprep.mubr.f32.mxu0 0.0
    %808 = vmatmul.mubr.f32.gmra.mxu0 %v739
    %v809 = vpop.f32.mrf.mxu0
    %v810 = vadd.f32 %v203, %v809
    %v811 = vpop.f32.mrf.mxu0
    %812 = vdwg.mxu0
    %v813 = vsel %vm206, %v278, -inf
    %814 = vmax.xlane.f32.xlu0 %v813
    %v815 = vpop.xlane.xlu0 %814
    %v816 = vsel %vm206, %v354, -inf
    %817 = vmax.xlane.f32.xlu0 %v816
    %v818 = vpop.xlane.xlu0 %817
    %v819 = vsel %vm206, %v430, -inf
    %820 = vmax.xlane.f32.xlu0 %v819
    %v821 = vpop.xlane.xlu0 %820
    %v822 = vsel %vm206, %v506, -inf
    %823 = vmax.xlane.f32.xlu0 %v822
    %v824 = vpop.xlane.xlu0 %823
    %v825 = vsel %vm206, %v582, -inf
    %826 = vmax.xlane.f32.xlu0 %v825
    %v827 = vpop.xlane.xlu0 %826
    %v828 = vsel %vm206, %v658, -inf
    %829 = vmax.xlane.f32.xlu0 %v828
    %v830 = vpop.xlane.xlu0 %829
    %v831 = vsel %vm206, %v734, -inf
    %832 = vmax.xlane.f32.xlu0 %v831
    %v833 = vpop.xlane.xlu0 %832
    %v834 = vsel %vm206, %v810, -inf
    %835 = vmax.xlane.f32.xlu0 %v834
    %v836 = vpop.xlane.xlu0 %835
    %v837 = vsub.f32 %v278, %v815
    %v838 = vsub.f32 %v354, %v818
    %v839 = vsub.f32 %v430, %v821
    %v840 = vsub.f32 %v506, %v824
    %v841 = vsub.f32 %v582, %v827
    %v842 = vsub.f32 %v658, %v830
    %v843 = vsub.f32 %v734, %v833
    %v844 = vsub.f32 %v810, %v836
    %v845 = vmul.f32 %v837, 1.442695
    %v846 = vpow.pop %v845
    %v847 = vmul.f32 %v838, 1.442695
    %v848 = vpow.pop %v847
    %v849 = vmul.f32 %v839, 1.442695
    %v850 = vpow.pop %v849
    %v851 = vmul.f32 %v840, 1.442695
    %v852 = vpow.pop %v851
    %v853 = vmul.f32 %v841, 1.442695
    %v854 = vpow.pop %v853
    %v855 = vmul.f32 %v842, 1.442695
    %v856 = vpow.pop %v855
    %v857 = vmul.f32 %v843, 1.442695
    %v858 = vpow.pop %v857
    %v859 = vmul.f32 %v844, 1.442695
    %v860 = vpow.pop %v859
    %v861 = vsel %vm206, %v846, 0.0
    %862 = vadd.xlane.f32.xlu0 %v861
    %v863 = vpop.xlane.xlu0 %862
    %v864 = vsel %vm206, %v848, 0.0
    %865 = vadd.xlane.f32.xlu0 %v864
    %v866 = vpop.xlane.xlu0 %865
    %v867 = vsel %vm206, %v850, 0.0
    %868 = vadd.xlane.f32.xlu0 %v867
    %v869 = vpop.xlane.xlu0 %868
    %v870 = vsel %vm206, %v852, 0.0
    %871 = vadd.xlane.f32.xlu0 %v870
    %v872 = vpop.xlane.xlu0 %871
    %v873 = vsel %vm206, %v854, 0.0
    %874 = vadd.xlane.f32.xlu0 %v873
    %v875 = vpop.xlane.xlu0 %874
    %v876 = vsel %vm206, %v856, 0.0
    %877 = vadd.xlane.f32.xlu0 %v876
    %v878 = vpop.xlane.xlu0 %877
    %v879 = vsel %vm206, %v858, 0.0
    %880 = vadd.xlane.f32.xlu0 %v879
    %v881 = vpop.xlane.xlu0 %880
    %v882 = vsel %vm206, %v860, 0.0
    %883 = vadd.xlane.f32.xlu0 %v882
    %v884 = vpop.xlane.xlu0 %883
    %v885 = vrcp.pop %v863
    %v886 = vrcp.pop %v866
    %v887 = vrcp.pop %v869
    %v888 = vrcp.pop %v872
    %v889 = vrcp.pop %v875
    %v890 = vrcp.pop %v878
    %v891 = vrcp.pop %v881
    %v892 = vrcp.pop %v884
    %v893 = vmul.f32 %v846, %v885
    %v894 = vmul.f32 %v848, %v886
    %v895 = vmul.f32 %v850, %v887
    %v896 = vmul.f32 %v852, %v888
    %v897 = vmul.f32 %v854, %v889
    %v898 = vmul.f32 %v856, %v890
    %v899 = vmul.f32 %v858, %v891
    %v900 = vmul.f32 %v860, %v892
    %901 = vrot.lane.b32.xlu0 %v174, 64
    %v902 = vpop.permute.xlu0 %901
    %v905 = vsel %vm206, %v893, 0
    %907 = vmatprep.subr.mxu0 0.0
    %908 = vmatpush1.msra.mxu0 0.0
    %909 = vmatprep.subr.mxu0 0.0
    %910 = vmatpush1.msra.mxu0 0.0
    %911 = vmatprep.subr.mxu0 0.0
    %912 = vmatpush1.msra.mxu0 0.0
    %913 = vmatprep.subr.mxu0 0.0
    %914 = vmatpush1.msra.mxu0 0.0
    %915 = vmatprep.subr.mxu0 0.0
    %916 = vmatpush1.msra.mxu0 0.0
    %917 = vmatprep.subr.mxu0 0.0
    %918 = vmatpush1.msra.mxu0 0.0
    %919 = vmatprep.subr.mxu0 0.0
    %920 = vmatpush1.msra.mxu0 0.0
    %921 = vmatprep.subr.mxu0 0.0
    %922 = vmatpush1.msra.mxu0 0.0
    %923 = vmatprep.subr.mxu0 0.0
    %924 = vmatpush1.msra.mxu0 0.0
    %925 = vmatprep.subr.mxu0 0.0
    %926 = vmatpush1.msra.mxu0 0.0
    %927 = vmatprep.subr.mxu0 0.0
    %928 = vmatpush1.msra.mxu0 0.0
    %929 = vmatprep.subr.mxu0 0.0
    %930 = vmatpush1.msra.mxu0 0.0
    %931 = vmatprep.subr.mxu0 0.0
    %932 = vmatpush1.msra.mxu0 0.0
    %933 = vmatprep.subr.mxu0 0.0
    %934 = vmatpush1.msra.mxu0 0.0
    %935 = vmatprep.subr.mxu0 0.0
    %936 = vmatpush1.msra.mxu0 0.0
    %937 = vmatprep.subr.mxu0 0.0
    %938 = vmatpush1.msra.mxu0 %v902
    %939 = vmatprep.subr.mxu0 0.0
    %940 = vmatpush2.msra.mxu0 0.0
    %941 = vmatprep.subr.mxu0 0.0
    %942 = vmatpush2.msra.mxu0 0.0
    %943 = vmatprep.subr.mxu0 0.0
    %944 = vmatpush2.msra.mxu0 0.0
    %945 = vmatprep.subr.mxu0 0.0
    %946 = vmatpush2.msra.mxu0 0.0
    %947 = vmatprep.subr.mxu0 0.0
    %948 = vmatpush2.msra.mxu0 0.0
    %949 = vmatprep.subr.mxu0 0.0
    %950 = vmatpush2.msra.mxu0 0.0
    %951 = vmatprep.subr.mxu0 0.0
    %952 = vmatpush2.msra.mxu0 0.0
    %953 = vmatprep.subr.mxu0 0.0
    %954 = vmatpush2.msra.mxu0 0.0
    %955 = vmatprep.subr.mxu0 0.0
    %956 = vmatpush2.msra.mxu0 0.0
    %957 = vmatprep.subr.mxu0 0.0
    %958 = vmatpush2.msra.mxu0 0.0
    %959 = vmatprep.subr.mxu0 0.0
    %960 = vmatpush2.msra.mxu0 0.0
    %961 = vmatprep.subr.mxu0 0.0
    %962 = vmatpush2.msra.mxu0 0.0
    %963 = vmatprep.subr.mxu0 0.0
    %964 = vmatpush2.msra.mxu0 0.0
    %965 = vmatprep.subr.mxu0 0.0
    %966 = vmatpush2.msra.mxu0 0.0
    %967 = vmatprep.subr.mxu0 0.0
    %968 = vmatpush2.msra.mxu0 0.0
    %969 = vmatprep.subr.mxu0 0.0
    %970 = vmatpush2.msra.mxu0 0.0
    %971 = vmatprep.mubr.f32.mxu0 0.0
    %972 = vmatmul.mubr.f32.gmra.mxu0 %v905
    %v973 = vpop.f32.mrf.mxu0
    %v974 = vadd.f32 0.0, %v973
    %v975 = vpop.f32.mrf.mxu0
    %976 = vdwg.mxu0
    %977 = vrot.lane.b32.xlu0 %v185, 64
    %v978 = vpop.permute.xlu0 %977
    %v981 = vsel %vm206, %v894, 0
    %983 = vmatprep.subr.mxu0 0.0
    %984 = vmatpush1.msra.mxu0 0.0
    %985 = vmatprep.subr.mxu0 0.0
    %986 = vmatpush1.msra.mxu0 0.0
    %987 = vmatprep.subr.mxu0 0.0
    %988 = vmatpush1.msra.mxu0 0.0
    %989 = vmatprep.subr.mxu0 0.0
    %990 = vmatpush1.msra.mxu0 0.0
    %991 = vmatprep.subr.mxu0 0.0
    %992 = vmatpush1.msra.mxu0 0.0
    %993 = vmatprep.subr.mxu0 0.0
    %994 = vmatpush1.msra.mxu0 0.0
    %995 = vmatprep.subr.mxu0 0.0
    %996 = vmatpush1.msra.mxu0 0.0
    %997 = vmatprep.subr.mxu0 0.0
    %998 = vmatpush1.msra.mxu0 0.0
    %999 = vmatprep.subr.mxu0 0.0
    %1000 = vmatpush1.msra.mxu0 0.0
    %1001 = vmatprep.subr.mxu0 0.0
    %1002 = vmatpush1.msra.mxu0 0.0
    %1003 = vmatprep.subr.mxu0 0.0
    %1004 = vmatpush1.msra.mxu0 0.0
    %1005 = vmatprep.subr.mxu0 0.0
    %1006 = vmatpush1.msra.mxu0 0.0
    %1007 = vmatprep.subr.mxu0 0.0
    %1008 = vmatpush1.msra.mxu0 0.0
    %1009 = vmatprep.subr.mxu0 0.0
    %1010 = vmatpush1.msra.mxu0 0.0
    %1011 = vmatprep.subr.mxu0 0.0
    %1012 = vmatpush1.msra.mxu0 0.0
    %1013 = vmatprep.subr.mxu0 0.0
    %1014 = vmatpush1.msra.mxu0 %v978
    %1015 = vmatprep.subr.mxu0 0.0
    %1016 = vmatpush2.msra.mxu0 0.0
    %1017 = vmatprep.subr.mxu0 0.0
    %1018 = vmatpush2.msra.mxu0 0.0
    %1019 = vmatprep.subr.mxu0 0.0
    %1020 = vmatpush2.msra.mxu0 0.0
    %1021 = vmatprep.subr.mxu0 0.0
    %1022 = vmatpush2.msra.mxu0 0.0
    %1023 = vmatprep.subr.mxu0 0.0
    %1024 = vmatpush2.msra.mxu0 0.0
    %1025 = vmatprep.subr.mxu0 0.0
    %1026 = vmatpush2.msra.mxu0 0.0
    %1027 = vmatprep.subr.mxu0 0.0
    %1028 = vmatpush2.msra.mxu0 0.0
    %1029 = vmatprep.subr.mxu0 0.0
    %1030 = vmatpush2.msra.mxu0 0.0
    %1031 = vmatprep.subr.mxu0 0.0
    %1032 = vmatpush2.msra.mxu0 0.0
    %1033 = vmatprep.subr.mxu0 0.0
    %1034 = vmatpush2.msra.mxu0 0.0
    %1035 = vmatprep.subr.mxu0 0.0
    %1036 = vmatpush2.msra.mxu0 0.0
    %1037 = vmatprep.subr.mxu0 0.0
    %1038 = vmatpush2.msra.mxu0 0.0
    %1039 = vmatprep.subr.mxu0 0.0
    %1040 = vmatpush2.msra.mxu0 0.0
    %1041 = vmatprep.subr.mxu0 0.0
    %1042 = vmatpush2.msra.mxu0 0.0
    %1043 = vmatprep.subr.mxu0 0.0
    %1044 = vmatpush2.msra.mxu0 0.0
    %1045 = vmatprep.subr.mxu0 0.0
    %1046 = vmatpush2.msra.mxu0 0.0
    %1047 = vmatprep.mubr.f32.mxu0 0.0
    %1048 = vmatmul.mubr.f32.gmra.mxu0 %v981
    %v1049 = vpop.f32.mrf.mxu0
    %v1050 = vadd.f32 0.0, %v1049
    %v1051 = vpop.f32.mrf.mxu0
    %1052 = vdwg.mxu0
    %1053 = vrot.lane.b32.xlu0 %v189, 64
    %v1054 = vpop.permute.xlu0 %1053
    %v1057 = vsel %vm206, %v895, 0
    %1059 = vmatprep.subr.mxu0 0.0
    %1060 = vmatpush1.msra.mxu0 0.0
    %1061 = vmatprep.subr.mxu0 0.0
    %1062 = vmatpush1.msra.mxu0 0.0
    %1063 = vmatprep.subr.mxu0 0.0
    %1064 = vmatpush1.msra.mxu0 0.0
    %1065 = vmatprep.subr.mxu0 0.0
    %1066 = vmatpush1.msra.mxu0 0.0
    %1067 = vmatprep.subr.mxu0 0.0
    %1068 = vmatpush1.msra.mxu0 0.0
    %1069 = vmatprep.subr.mxu0 0.0
    %1070 = vmatpush1.msra.mxu0 0.0
    %1071 = vmatprep.subr.mxu0 0.0
    %1072 = vmatpush1.msra.mxu0 0.0
    %1073 = vmatprep.subr.mxu0 0.0
    %1074 = vmatpush1.msra.mxu0 0.0
    %1075 = vmatprep.subr.mxu0 0.0
    %1076 = vmatpush1.msra.mxu0 0.0
    %1077 = vmatprep.subr.mxu0 0.0
    %1078 = vmatpush1.msra.mxu0 0.0
    %1079 = vmatprep.subr.mxu0 0.0
    %1080 = vmatpush1.msra.mxu0 0.0
    %1081 = vmatprep.subr.mxu0 0.0
    %1082 = vmatpush1.msra.mxu0 0.0
    %1083 = vmatprep.subr.mxu0 0.0
    %1084 = vmatpush1.msra.mxu0 0.0
    %1085 = vmatprep.subr.mxu0 0.0
    %1086 = vmatpush1.msra.mxu0 0.0
    %1087 = vmatprep.subr.mxu0 0.0
    %1088 = vmatpush1.msra.mxu0 0.0
    %1089 = vmatprep.subr.mxu0 0.0
    %1090 = vmatpush1.msra.mxu0 %v1054
    %1091 = vmatprep.subr.mxu0 0.0
    %1092 = vmatpush2.msra.mxu0 0.0
    %1093 = vmatprep.subr.mxu0 0.0
    %1094 = vmatpush2.msra.mxu0 0.0
    %1095 = vmatprep.subr.mxu0 0.0
    %1096 = vmatpush2.msra.mxu0 0.0
    %1097 = vmatprep.subr.mxu0 0.0
    %1098 = vmatpush2.msra.mxu0 0.0
    %1099 = vmatprep.subr.mxu0 0.0
    %1100 = vmatpush2.msra.mxu0 0.0
    %1101 = vmatprep.subr.mxu0 0.0
    %1102 = vmatpush2.msra.mxu0 0.0
    %1103 = vmatprep.subr.mxu0 0.0
    %1104 = vmatpush2.msra.mxu0 0.0
    %1105 = vmatprep.subr.mxu0 0.0
    %1106 = vmatpush2.msra.mxu0 0.0
    %1107 = vmatprep.subr.mxu0 0.0
    %1108 = vmatpush2.msra.mxu0 0.0
    %1109 = vmatprep.subr.mxu0 0.0
    %1110 = vmatpush2.msra.mxu0 0.0
    %1111 = vmatprep.subr.mxu0 0.0
    %1112 = vmatpush2.msra.mxu0 0.0
    %1113 = vmatprep.subr.mxu0 0.0
    %1114 = vmatpush2.msra.mxu0 0.0
    %1115 = vmatprep.subr.mxu0 0.0
    %1116 = vmatpush2.msra.mxu0 0.0
    %1117 = vmatprep.subr.mxu0 0.0
    %1118 = vmatpush2.msra.mxu0 0.0
    %1119 = vmatprep.subr.mxu0 0.0
    %1120 = vmatpush2.msra.mxu0 0.0
    %1121 = vmatprep.subr.mxu0 0.0
    %1122 = vmatpush2.msra.mxu0 0.0
    %1123 = vmatprep.mubr.f32.mxu0 0.0
    %1124 = vmatmul.mubr.f32.gmra.mxu0 %v1057
    %v1125 = vpop.f32.mrf.mxu0
    %v1126 = vadd.f32 0.0, %v1125
    %v1127 = vpop.f32.mrf.mxu0
    %1128 = vdwg.mxu0
    %1129 = vrot.lane.b32.xlu0 %v193, 64
    %v1130 = vpop.permute.xlu0 %1129
    %v1133 = vsel %vm206, %v896, 0
    %1135 = vmatprep.subr.mxu0 0.0
    %1136 = vmatpush1.msra.mxu0 0.0
    %1137 = vmatprep.subr.mxu0 0.0
    %1138 = vmatpush1.msra.mxu0 0.0
    %1139 = vmatprep.subr.mxu0 0.0
    %1140 = vmatpush1.msra.mxu0 0.0
    %1141 = vmatprep.subr.mxu0 0.0
    %1142 = vmatpush1.msra.mxu0 0.0
    %1143 = vmatprep.subr.mxu0 0.0
    %1144 = vmatpush1.msra.mxu0 0.0
    %1145 = vmatprep.subr.mxu0 0.0
    %1146 = vmatpush1.msra.mxu0 0.0
    %1147 = vmatprep.subr.mxu0 0.0
    %1148 = vmatpush1.msra.mxu0 0.0
    %1149 = vmatprep.subr.mxu0 0.0
    %1150 = vmatpush1.msra.mxu0 0.0
    %1151 = vmatprep.subr.mxu0 0.0
    %1152 = vmatpush1.msra.mxu0 0.0
    %1153 = vmatprep.subr.mxu0 0.0
    %1154 = vmatpush1.msra.mxu0 0.0
    %1155 = vmatprep.subr.mxu0 0.0
    %1156 = vmatpush1.msra.mxu0 0.0
    %1157 = vmatprep.subr.mxu0 0.0
    %1158 = vmatpush1.msra.mxu0 0.0
    %1159 = vmatprep.subr.mxu0 0.0
    %1160 = vmatpush1.msra.mxu0 0.0
    %1161 = vmatprep.subr.mxu0 0.0
    %1162 = vmatpush1.msra.mxu0 0.0
    %1163 = vmatprep.subr.mxu0 0.0
    %1164 = vmatpush1.msra.mxu0 0.0
    %1165 = vmatprep.subr.mxu0 0.0
    %1166 = vmatpush1.msra.mxu0 %v1130
    %1167 = vmatprep.subr.mxu0 0.0
    %1168 = vmatpush2.msra.mxu0 0.0
    %1169 = vmatprep.subr.mxu0 0.0
    %1170 = vmatpush2.msra.mxu0 0.0
    %1171 = vmatprep.subr.mxu0 0.0
    %1172 = vmatpush2.msra.mxu0 0.0
    %1173 = vmatprep.subr.mxu0 0.0
    %1174 = vmatpush2.msra.mxu0 0.0
    %1175 = vmatprep.subr.mxu0 0.0
    %1176 = vmatpush2.msra.mxu0 0.0
    %1177 = vmatprep.subr.mxu0 0.0
    %1178 = vmatpush2.msra.mxu0 0.0
    %1179 = vmatprep.subr.mxu0 0.0
    %1180 = vmatpush2.msra.mxu0 0.0
    %1181 = vmatprep.subr.mxu0 0.0
    %1182 = vmatpush2.msra.mxu0 0.0
    %1183 = vmatprep.subr.mxu0 0.0
    %1184 = vmatpush2.msra.mxu0 0.0
    %1185 = vmatprep.subr.mxu0 0.0
    %1186 = vmatpush2.msra.mxu0 0.0
    %1187 = vmatprep.subr.mxu0 0.0
    %1188 = vmatpush2.msra.mxu0 0.0
    %1189 = vmatprep.subr.mxu0 0.0
    %1190 = vmatpush2.msra.mxu0 0.0
    %1191 = vmatprep.subr.mxu0 0.0
    %1192 = vmatpush2.msra.mxu0 0.0
    %1193 = vmatprep.subr.mxu0 0.0
    %1194 = vmatpush2.msra.mxu0 0.0
    %1195 = vmatprep.subr.mxu0 0.0
    %1196 = vmatpush2.msra.mxu0 0.0
    %1197 = vmatprep.subr.mxu0 0.0
    %1198 = vmatpush2.msra.mxu0 0.0
    %1199 = vmatprep.mubr.f32.mxu0 0.0
    %1200 = vmatmul.mubr.f32.gmra.mxu0 %v1133
    %v1201 = vpop.f32.mrf.mxu0
    %v1202 = vadd.f32 0.0, %v1201
    %v1203 = vpop.f32.mrf.mxu0
    %1204 = vdwg.mxu0
    %1205 = vrot.lane.b32.xlu0 %v179, 64
    %v1206 = vpop.permute.xlu0 %1205
    %v1209 = vsel %vm206, %v897, 0
    %1211 = vmatprep.subr.mxu0 0.0
    %1212 = vmatpush1.msra.mxu0 0.0
    %1213 = vmatprep.subr.mxu0 0.0
    %1214 = vmatpush1.msra.mxu0 0.0
    %1215 = vmatprep.subr.mxu0 0.0
    %1216 = vmatpush1.msra.mxu0 0.0
    %1217 = vmatprep.subr.mxu0 0.0
    %1218 = vmatpush1.msra.mxu0 0.0
    %1219 = vmatprep.subr.mxu0 0.0
    %1220 = vmatpush1.msra.mxu0 0.0
    %1221 = vmatprep.subr.mxu0 0.0
    %1222 = vmatpush1.msra.mxu0 0.0
    %1223 = vmatprep.subr.mxu0 0.0
    %1224 = vmatpush1.msra.mxu0 0.0
    %1225 = vmatprep.subr.mxu0 0.0
    %1226 = vmatpush1.msra.mxu0 0.0
    %1227 = vmatprep.subr.mxu0 0.0
    %1228 = vmatpush1.msra.mxu0 0.0
    %1229 = vmatprep.subr.mxu0 0.0
    %1230 = vmatpush1.msra.mxu0 0.0
    %1231 = vmatprep.subr.mxu0 0.0
    %1232 = vmatpush1.msra.mxu0 0.0
    %1233 = vmatprep.subr.mxu0 0.0
    %1234 = vmatpush1.msra.mxu0 0.0
    %1235 = vmatprep.subr.mxu0 0.0
    %1236 = vmatpush1.msra.mxu0 0.0
    %1237 = vmatprep.subr.mxu0 0.0
    %1238 = vmatpush1.msra.mxu0 0.0
    %1239 = vmatprep.subr.mxu0 0.0
    %1240 = vmatpush1.msra.mxu0 0.0
    %1241 = vmatprep.subr.mxu0 0.0
    %1242 = vmatpush1.msra.mxu0 %v1206
    %1243 = vmatprep.subr.mxu0 0.0
    %1244 = vmatpush2.msra.mxu0 0.0
    %1245 = vmatprep.subr.mxu0 0.0
    %1246 = vmatpush2.msra.mxu0 0.0
    %1247 = vmatprep.subr.mxu0 0.0
    %1248 = vmatpush2.msra.mxu0 0.0
    %1249 = vmatprep.subr.mxu0 0.0
    %1250 = vmatpush2.msra.mxu0 0.0
    %1251 = vmatprep.subr.mxu0 0.0
    %1252 = vmatpush2.msra.mxu0 0.0
    %1253 = vmatprep.subr.mxu0 0.0
    %1254 = vmatpush2.msra.mxu0 0.0
    %1255 = vmatprep.subr.mxu0 0.0
    %1256 = vmatpush2.msra.mxu0 0.0
    %1257 = vmatprep.subr.mxu0 0.0
    %1258 = vmatpush2.msra.mxu0 0.0
    %1259 = vmatprep.subr.mxu0 0.0
    %1260 = vmatpush2.msra.mxu0 0.0
    %1261 = vmatprep.subr.mxu0 0.0
    %1262 = vmatpush2.msra.mxu0 0.0
    %1263 = vmatprep.subr.mxu0 0.0
    %1264 = vmatpush2.msra.mxu0 0.0
    %1265 = vmatprep.subr.mxu0 0.0
    %1266 = vmatpush2.msra.mxu0 0.0
    %1267 = vmatprep.subr.mxu0 0.0
    %1268 = vmatpush2.msra.mxu0 0.0
    %1269 = vmatprep.subr.mxu0 0.0
    %1270 = vmatpush2.msra.mxu0 0.0
    %1271 = vmatprep.subr.mxu0 0.0
    %1272 = vmatpush2.msra.mxu0 0.0
    %1273 = vmatprep.subr.mxu0 0.0
    %1274 = vmatpush2.msra.mxu0 0.0
    %1275 = vmatprep.mubr.f32.mxu0 0.0
    %1276 = vmatmul.mubr.f32.gmra.mxu0 %v1209
    %v1277 = vpop.f32.mrf.mxu0
    %v1278 = vadd.f32 0.0, %v1277
    %v1279 = vpop.f32.mrf.mxu0
    %1280 = vdwg.mxu0
    %1281 = vrot.lane.b32.xlu0 %v187, 64
    %v1282 = vpop.permute.xlu0 %1281
    %v1285 = vsel %vm206, %v898, 0
    %1287 = vmatprep.subr.mxu0 0.0
    %1288 = vmatpush1.msra.mxu0 0.0
    %1289 = vmatprep.subr.mxu0 0.0
    %1290 = vmatpush1.msra.mxu0 0.0
    %1291 = vmatprep.subr.mxu0 0.0
    %1292 = vmatpush1.msra.mxu0 0.0
    %1293 = vmatprep.subr.mxu0 0.0
    %1294 = vmatpush1.msra.mxu0 0.0
    %1295 = vmatprep.subr.mxu0 0.0
    %1296 = vmatpush1.msra.mxu0 0.0
    %1297 = vmatprep.subr.mxu0 0.0
    %1298 = vmatpush1.msra.mxu0 0.0
    %1299 = vmatprep.subr.mxu0 0.0
    %1300 = vmatpush1.msra.mxu0 0.0
    %1301 = vmatprep.subr.mxu0 0.0
    %1302 = vmatpush1.msra.mxu0 0.0
    %1303 = vmatprep.subr.mxu0 0.0
    %1304 = vmatpush1.msra.mxu0 0.0
    %1305 = vmatprep.subr.mxu0 0.0
    %1306 = vmatpush1.msra.mxu0 0.0
    %1307 = vmatprep.subr.mxu0 0.0
    %1308 = vmatpush1.msra.mxu0 0.0
    %1309 = vmatprep.subr.mxu0 0.0
    %1310 = vmatpush1.msra.mxu0 0.0
    %1311 = vmatprep.subr.mxu0 0.0
    %1312 = vmatpush1.msra.mxu0 0.0
    %1313 = vmatprep.subr.mxu0 0.0
    %1314 = vmatpush1.msra.mxu0 0.0
    %1315 = vmatprep.subr.mxu0 0.0
    %1316 = vmatpush1.msra.mxu0 0.0
    %1317 = vmatprep.subr.mxu0 0.0
    %1318 = vmatpush1.msra.mxu0 %v1282
    %1319 = vmatprep.subr.mxu0 0.0
    %1320 = vmatpush2.msra.mxu0 0.0
    %1321 = vmatprep.subr.mxu0 0.0
    %1322 = vmatpush2.msra.mxu0 0.0
    %1323 = vmatprep.subr.mxu0 0.0
    %1324 = vmatpush2.msra.mxu0 0.0
    %1325 = vmatprep.subr.mxu0 0.0
    %1326 = vmatpush2.msra.mxu0 0.0
    %1327 = vmatprep.subr.mxu0 0.0
    %1328 = vmatpush2.msra.mxu0 0.0
    %1329 = vmatprep.subr.mxu0 0.0
    %1330 = vmatpush2.msra.mxu0 0.0
    %1331 = vmatprep.subr.mxu0 0.0
    %1332 = vmatpush2.msra.mxu0 0.0
    %1333 = vmatprep.subr.mxu0 0.0
    %1334 = vmatpush2.msra.mxu0 0.0
    %1335 = vmatprep.subr.mxu0 0.0
    %1336 = vmatpush2.msra.mxu0 0.0
    %1337 = vmatprep.subr.mxu0 0.0
    %1338 = vmatpush2.msra.mxu0 0.0
    %1339 = vmatprep.subr.mxu0 0.0
    %1340 = vmatpush2.msra.mxu0 0.0
    %1341 = vmatprep.subr.mxu0 0.0
    %1342 = vmatpush2.msra.mxu0 0.0
    %1343 = vmatprep.subr.mxu0 0.0
    %1344 = vmatpush2.msra.mxu0 0.0
    %1345 = vmatprep.subr.mxu0 0.0
    %1346 = vmatpush2.msra.mxu0 0.0
    %1347 = vmatprep.subr.mxu0 0.0
    %1348 = vmatpush2.msra.mxu0 0.0
    %1349 = vmatprep.subr.mxu0 0.0
    %1350 = vmatpush2.msra.mxu0 0.0
    %1351 = vmatprep.mubr.f32.mxu0 0.0
    %1352 = vmatmul.mubr.f32.gmra.mxu0 %v1285
    %v1353 = vpop.f32.mrf.mxu0
    %v1354 = vadd.f32 0.0, %v1353
    %v1355 = vpop.f32.mrf.mxu0
    %1356 = vdwg.mxu0
    %1357 = vrot.lane.b32.xlu0 %v191, 64
    %v1358 = vpop.permute.xlu0 %1357
    %v1361 = vsel %vm206, %v899, 0
    %1363 = vmatprep.subr.mxu0 0.0
    %1364 = vmatpush1.msra.mxu0 0.0
    %1365 = vmatprep.subr.mxu0 0.0
    %1366 = vmatpush1.msra.mxu0 0.0
    %1367 = vmatprep.subr.mxu0 0.0
    %1368 = vmatpush1.msra.mxu0 0.0
    %1369 = vmatprep.subr.mxu0 0.0
    %1370 = vmatpush1.msra.mxu0 0.0
    %1371 = vmatprep.subr.mxu0 0.0
    %1372 = vmatpush1.msra.mxu0 0.0
    %1373 = vmatprep.subr.mxu0 0.0
    %1374 = vmatpush1.msra.mxu0 0.0
    %1375 = vmatprep.subr.mxu0 0.0
    %1376 = vmatpush1.msra.mxu0 0.0
    %1377 = vmatprep.subr.mxu0 0.0
    %1378 = vmatpush1.msra.mxu0 0.0
    %1379 = vmatprep.subr.mxu0 0.0
    %1380 = vmatpush1.msra.mxu0 0.0
    %1381 = vmatprep.subr.mxu0 0.0
    %1382 = vmatpush1.msra.mxu0 0.0
    %1383 = vmatprep.subr.mxu0 0.0
    %1384 = vmatpush1.msra.mxu0 0.0
    %1385 = vmatprep.subr.mxu0 0.0
    %1386 = vmatpush1.msra.mxu0 0.0
    %1387 = vmatprep.subr.mxu0 0.0
    %1388 = vmatpush1.msra.mxu0 0.0
    %1389 = vmatprep.subr.mxu0 0.0
    %1390 = vmatpush1.msra.mxu0 0.0
    %1391 = vmatprep.subr.mxu0 0.0
    %1392 = vmatpush1.msra.mxu0 0.0
    %1393 = vmatprep.subr.mxu0 0.0
    %1394 = vmatpush1.msra.mxu0 %v1358
    %1395 = vmatprep.subr.mxu0 0.0
    %1396 = vmatpush2.msra.mxu0 0.0
    %1397 = vmatprep.subr.mxu0 0.0
    %1398 = vmatpush2.msra.mxu0 0.0
    %1399 = vmatprep.subr.mxu0 0.0
    %1400 = vmatpush2.msra.mxu0 0.0
    %1401 = vmatprep.subr.mxu0 0.0
    %1402 = vmatpush2.msra.mxu0 0.0
    %1403 = vmatprep.subr.mxu0 0.0
    %1404 = vmatpush2.msra.mxu0 0.0
    %1405 = vmatprep.subr.mxu0 0.0
    %1406 = vmatpush2.msra.mxu0 0.0
    %1407 = vmatprep.subr.mxu0 0.0
    %1408 = vmatpush2.msra.mxu0 0.0
    %1409 = vmatprep.subr.mxu0 0.0
    %1410 = vmatpush2.msra.mxu0 0.0
    %1411 = vmatprep.subr.mxu0 0.0
    %1412 = vmatpush2.msra.mxu0 0.0
    %1413 = vmatprep.subr.mxu0 0.0
    %1414 = vmatpush2.msra.mxu0 0.0
    %1415 = vmatprep.subr.mxu0 0.0
    %1416 = vmatpush2.msra.mxu0 0.0
    %1417 = vmatprep.subr.mxu0 0.0
    %1418 = vmatpush2.msra.mxu0 0.0
    %1419 = vmatprep.subr.mxu0 0.0
    %1420 = vmatpush2.msra.mxu0 0.0
    %1421 = vmatprep.subr.mxu0 0.0
    %1422 = vmatpush2.msra.mxu0 0.0
    %1423 = vmatprep.subr.mxu0 0.0
    %1424 = vmatpush2.msra.mxu0 0.0
    %1425 = vmatprep.subr.mxu0 0.0
    %1426 = vmatpush2.msra.mxu0 0.0
    %1427 = vmatprep.mubr.f32.mxu0 0.0
    %1428 = vmatmul.mubr.f32.gmra.mxu0 %v1361
    %v1429 = vpop.f32.mrf.mxu0
    %v1430 = vadd.f32 0.0, %v1429
    %v1431 = vpop.f32.mrf.mxu0
    %1432 = vdwg.mxu0
    %1433 = vrot.lane.b32.xlu0 %v195, 64
    %v1434 = vpop.permute.xlu0 %1433
    %v1437 = vsel %vm206, %v900, 0
    %1439 = vmatprep.subr.mxu0 0.0
    %1440 = vmatpush1.msra.mxu0 0.0
    %1441 = vmatprep.subr.mxu0 0.0
    %1442 = vmatpush1.msra.mxu0 0.0
    %1443 = vmatprep.subr.mxu0 0.0
    %1444 = vmatpush1.msra.mxu0 0.0
    %1445 = vmatprep.subr.mxu0 0.0
    %1446 = vmatpush1.msra.mxu0 0.0
    %1447 = vmatprep.subr.mxu0 0.0
    %1448 = vmatpush1.msra.mxu0 0.0
    %1449 = vmatprep.subr.mxu0 0.0
    %1450 = vmatpush1.msra.mxu0 0.0
    %1451 = vmatprep.subr.mxu0 0.0
    %1452 = vmatpush1.msra.mxu0 0.0
    %1453 = vmatprep.subr.mxu0 0.0
    %1454 = vmatpush1.msra.mxu0 0.0
    %1455 = vmatprep.subr.mxu0 0.0
    %1456 = vmatpush1.msra.mxu0 0.0
    %1457 = vmatprep.subr.mxu0 0.0
    %1458 = vmatpush1.msra.mxu0 0.0
    %1459 = vmatprep.subr.mxu0 0.0
    %1460 = vmatpush1.msra.mxu0 0.0
    %1461 = vmatprep.subr.mxu0 0.0
    %1462 = vmatpush1.msra.mxu0 0.0
    %1463 = vmatprep.subr.mxu0 0.0
    %1464 = vmatpush1.msra.mxu0 0.0
    %1465 = vmatprep.subr.mxu0 0.0
    %1466 = vmatpush1.msra.mxu0 0.0
    %1467 = vmatprep.subr.mxu0 0.0
    %1468 = vmatpush1.msra.mxu0 0.0
    %1469 = vmatprep.subr.mxu0 0.0
    %1470 = vmatpush1.msra.mxu0 %v1434
    %1471 = vmatprep.subr.mxu0 0.0
    %1472 = vmatpush2.msra.mxu0 0.0
    %1473 = vmatprep.subr.mxu0 0.0
    %1474 = vmatpush2.msra.mxu0 0.0
    %1475 = vmatprep.subr.mxu0 0.0
    %1476 = vmatpush2.msra.mxu0 0.0
    %1477 = vmatprep.subr.mxu0 0.0
    %1478 = vmatpush2.msra.mxu0 0.0
    %1479 = vmatprep.subr.mxu0 0.0
    %1480 = vmatpush2.msra.mxu0 0.0
    %1481 = vmatprep.subr.mxu0 0.0
    %1482 = vmatpush2.msra.mxu0 0.0
    %1483 = vmatprep.subr.mxu0 0.0
    %1484 = vmatpush2.msra.mxu0 0.0
    %1485 = vmatprep.subr.mxu0 0.0
    %1486 = vmatpush2.msra.mxu0 0.0
    %1487 = vmatprep.subr.mxu0 0.0
    %1488 = vmatpush2.msra.mxu0 0.0
    %1489 = vmatprep.subr.mxu0 0.0
    %1490 = vmatpush2.msra.mxu0 0.0
    %1491 = vmatprep.subr.mxu0 0.0
    %1492 = vmatpush2.msra.mxu0 0.0
    %1493 = vmatprep.subr.mxu0 0.0
    %1494 = vmatpush2.msra.mxu0 0.0
    %1495 = vmatprep.subr.mxu0 0.0
    %1496 = vmatpush2.msra.mxu0 0.0
    %1497 = vmatprep.subr.mxu0 0.0
    %1498 = vmatpush2.msra.mxu0 0.0
    %1499 = vmatprep.subr.mxu0 0.0
    %1500 = vmatpush2.msra.mxu0 0.0
    %1501 = vmatprep.subr.mxu0 0.0
    %1502 = vmatpush2.msra.mxu0 0.0
    %1503 = vmatprep.mubr.f32.mxu0 0.0
    %1504 = vmatmul.mubr.f32.gmra.mxu0 %v1437
    %v1505 = vpop.f32.mrf.mxu0
    %v1506 = vadd.f32 0.0, %v1505
    %v1507 = vpop.f32.mrf.mxu0
    %1508 = vdwg.mxu0
    %1511 = vrot.lane.b32.xlu0 %v1050, 8
    %v1512 = vpop.permute.xlu0 %1511
    %1513 = vrot.lane.b32.xlu0 %v1354, 8
    %v1514 = vpop.permute.xlu0 %1513
    %1519 = vrot.lane.b32.xlu0 %v1126, 16
    %v1520 = vpop.permute.xlu0 %1519
    %1521 = vrot.lane.b32.xlu0 %v1430, 16
    %v1522 = vpop.permute.xlu0 %1521
    %1527 = vrot.lane.b32.xlu0 %v1202, 24
    %v1528 = vpop.permute.xlu0 %1527
    %1529 = vrot.lane.b32.xlu0 %v1506, 24
    %v1530 = vpop.permute.xlu0 %1529
    %v1533 = vsel %vm206, %v974, %v1512
    %v1534 = vsel %vm206, %v1278, %v1514
    %vm1535 = vcmask 130048
    %v1536 = vsel %vm1535, %v1533, %v1520
    %v1537 = vsel %vm1535, %v1534, %v1522
    %vm1538 = vcmask 195584
    %v1539 = vsel %vm1538, %v1536, %v1528
    %v1540 = vsel %vm1538, %v1537, %v1530
    %v1541 = vld [vmem:[#allocation8] sm:$0xff]
    %v1542 = vld [vmem:[#allocation8 + $0x8] sm:$0xff]
    %v1543 = vld [vmem:[#allocation8 + $0x10] sm:$0xff]
    %v1544 = vld [vmem:[#allocation8 + $0x18] sm:$0xff]
    %v1545 = vld [vmem:[%s5] sm:$0x1]
    %v1547 = vlaneseq
    %v1548 = vshrl.u32 %v1547, 7
    %v1549 = vsub.s32 0, %v1548
    %v1550 = vrot.slane %v1545, %v1549
    %vm1552 = vcmask 261120
    %v1554 = vsel %vm1552, %v1539, 0
    %v1557 = vsel %vm1552, %v1540, 0
    %1559 = vmatprep.subr.mxu0 0.0
    %1560 = vmatpush1.msra.mxu0 0.0
    %1561 = vmatprep.subr.mxu0 0.0
    %1562 = vmatpush1.msra.mxu0 0.0
    %1563 = vmatprep.subr.mxu0 0.0
    %1564 = vmatpush1.msra.mxu0 0.0
    %1565 = vmatprep.subr.mxu0 0.0
    %1566 = vmatpush1.msra.mxu0 0.0
    %1567 = vmatprep.subr.mxu0 0.0
    %1568 = vmatpush1.msra.mxu0 0.0
    %1569 = vmatprep.subr.mxu0 0.0
    %1570 = vmatpush1.msra.mxu0 0.0
    %1571 = vmatprep.subr.mxu0 0.0
    %1572 = vmatpush1.msra.mxu0 0.0
    %1573 = vmatprep.subr.mxu0 0.0
    %1574 = vmatpush1.msra.mxu0 0.0
    %1575 = vmatprep.subr.mxu0 0.0
    %1576 = vmatpush1.msra.mxu0 0.0
    %1577 = vmatprep.subr.mxu0 0.0
    %1578 = vmatpush1.msra.mxu0 0.0
    %1579 = vmatprep.subr.mxu0 0.0
    %1580 = vmatpush1.msra.mxu0 0.0
    %1581 = vmatprep.subr.mxu0 0.0
    %1582 = vmatpush1.msra.mxu0 0.0
    %1583 = vmatprep.subr.mxu0 0.0
    %1584 = vmatpush1.msra.mxu0 %v1544
    %1585 = vmatprep.subr.mxu0 0.0
    %1586 = vmatpush1.msra.mxu0 %v1543
    %1587 = vmatprep.subr.mxu0 0.0
    %1588 = vmatpush1.msra.mxu0 %v1542
    %1589 = vmatprep.subr.mxu0 0.0
    %1590 = vmatpush1.msra.mxu0 %v1541
    %1591 = vmatprep.subr.mxu0 0.0
    %1592 = vmatpush2.msra.mxu0 0.0
    %1593 = vmatprep.subr.mxu0 0.0
    %1594 = vmatpush2.msra.mxu0 0.0
    %1595 = vmatprep.subr.mxu0 0.0
    %1596 = vmatpush2.msra.mxu0 0.0
    %1597 = vmatprep.subr.mxu0 0.0
    %1598 = vmatpush2.msra.mxu0 0.0
    %1599 = vmatprep.subr.mxu0 0.0
    %1600 = vmatpush2.msra.mxu0 0.0
    %1601 = vmatprep.subr.mxu0 0.0
    %1602 = vmatpush2.msra.mxu0 0.0
    %1603 = vmatprep.subr.mxu0 0.0
    %1604 = vmatpush2.msra.mxu0 0.0
    %1605 = vmatprep.subr.mxu0 0.0
    %1606 = vmatpush2.msra.mxu0 0.0
    %1607 = vmatprep.subr.mxu0 0.0
    %1608 = vmatpush2.msra.mxu0 0.0
    %1609 = vmatprep.subr.mxu0 0.0
    %1610 = vmatpush2.msra.mxu0 0.0
    %1611 = vmatprep.subr.mxu0 0.0
    %1612 = vmatpush2.msra.mxu0 0.0
    %1613 = vmatprep.subr.mxu0 0.0
    %1614 = vmatpush2.msra.mxu0 0.0
    %1615 = vmatprep.subr.mxu0 0.0
    %1616 = vmatpush2.msra.mxu0 0.0
    %1617 = vmatprep.subr.mxu0 0.0
    %1618 = vmatpush2.msra.mxu0 0.0
    %1619 = vmatprep.subr.mxu0 0.0
    %1620 = vmatpush2.msra.mxu0 0.0
    %1621 = vmatprep.subr.mxu0 0.0
    %1622 = vmatpush2.msra.mxu0 0.0
    %1623 = vmatprep.mubr.f32.mxu0 0.0
    %1624 = vmatmul.mubr.f32.gmra.mxu0 %v1554
    %v1625 = vpop.f32.mrf.mxu0
    %v1626 = vadd.f32 %v1550, %v1625
    %v1627 = vpop.f32.mrf.mxu0
    %1628 = vmatprep.mubr.f32.mxu0 0.0
    %1629 = vmatmul.mubr.f32.gmra.mxu0 %v1557
    %v1630 = vpop.f32.mrf.mxu0
    %v1631 = vadd.f32 %v1550, %v1630
    %v1632 = vpop.f32.mrf.mxu0
    %1633 = vdwg.mxu0
    %1634 = vst.msk [vmem:[#allocation10] sm:$0xff] %vm1552, %v1626
    %1635 = vst.msk [vmem:[#allocation10 + $0x8] sm:$0xff] %vm1552, %v1631
    // Predicated region
    $region42: #{tpu_custom_call.1} parent=1 // pred_check
      _
    $region43: #{tpu_custom_call.1} parent=1 // pred_check_branch
      %1637 = sbr.rel (0) target = $region45
    $region44: #{tpu_custom_call.1} parent=1 // pred_region
      %s1639 = ssub.s32 256, 256
      %1640 = vsyncadd [#allocation4], %s1639
      %s1641 = sshll.u32 [#allocation10], 4
      %s1642 = int_to_ptr.vmem [resolvable:$true] %s1641
      %1647 = dma.vmem_to_hbm [thread:$0]  %s1642, 256, %s6, [#allocation4], 128, 128, 8
    $region45: #{tpu_custom_call.1} parent=1 // pred_fallthru
      _
    // Predicated region
    $region46: #{tpu_custom_call.1} parent=1 // pred_check
      _
    $region47: #{tpu_custom_call.1} parent=1 // pred_check_branch
      %1649 = sbr.rel (0) target = $region49
    $region48: #{tpu_custom_call.1} parent=1 // pred_region
      %1650 = dma.done [#allocation4], 256
    $region49: #{tpu_custom_call.1} parent=1 // pred_fallthru
      _
    %1651 = vsyncpa [#allocation3], 1
    %1652 = vsyncpa [#allocation6], 1
    %1653 = vsyncpa [#allocation9], 1
    %1654 = vsyncpa [#allocation4], 1

</llo_original>
